<compile_context>
chip_gen: v5e
topology: v5e:2x2
jax: 0.10.0
libtpu: 0.0.40
codegen_flags: <defaults>
</compile_context>

<pallas_src>
import jax
import jax.numpy as jnp
import numpy as np
from jax.experimental import pallas as pl
from jax.experimental.pallas import tpu as pltpu


LRELU_SLOPE = 0.1

# Layer table of the torch module: (Cout, Cin, KH, KW, stride, pad)
LAYER_DEFS = (
    (64, 32, 3, 3, 1, 1),
    (64, 64, 2, 2, 2, 0),
    (64, 64, 2, 2, 1, 0),
    (64, 64, 2, 2, 1, 1),
    (1, 64, 2, 2, 1, 0),
)

MAX_BT = 8          # max batch elements folded into one grid step


def _lrelu(y):
    return jnp.where(y > 0, y, LRELU_SLOPE * y)


def _round_up(x, m):
    return ((x + m - 1) // m) * m


# ----------------------------------------------------------------------------
# Fused Pallas kernel: the whole 5-layer conv net, channels-major, for Bt batch
# elements per grid step.  All intermediate activations stay in VMEM / vregs.
# ----------------------------------------------------------------------------
def _make_fused_kernel(bt):

    def kernel(q_ref, p_ref,
               g1, w1, b1,
               g2, w2, b2,
               g3, w3, b3,
               g4, w4, b4,
               g5, w5, b5,
               out_ref):

        def conv_lrelu(act, g_ref, w_ref, b_ref):
            # act:   (cin, m_in)       channels-major activation
            # g_ref: (m_in, T*mo_pad)  stacked 0/1 shift/gather matrix
            # w_ref: (cout, T*cin)     stacked conv weights (tap-major K)
            # b_ref: (cout, 1)
            cin = act.shape[0]
            cout, tcin = w_ref.shape
            ntaps = tcin // cin
            mo_pad = g_ref.shape[1] // ntaps
            # 1 MXU matmul: all tap shifts at once (pure 0/1 data movement).
            shifted = jnp.dot(act, g_ref[...],
                              preferred_element_type=jnp.float32)      # (cin, T*mo_pad)
            # im2col patch: static aligned lane slices + sublane concat (no MXU).
            patch = jnp.concatenate(
                [shifted[:, t * mo_pad:(t + 1) * mo_pad] for t in range(ntaps)],
                axis=0)                                                 # (T*cin, mo_pad)
            # 1 MXU matmul: stacked weights, K = T*cin (256 / 288).
            y = jnp.dot(w_ref[...], patch,
                        preferred_element_type=jnp.float32)            # (cout, mo_pad)
            return _lrelu(y + b_ref[...])

        mo_out = out_ref.shape[2]            # valid output positions of the net

        for b in range(bt):                  # unrolled at trace time
            # Channels-major input: rows 0..15 = q channels, rows 16..31 = p channels.
            x0 = jnp.concatenate([q_ref[b], p_ref[b]], axis=0)          # (32, H*W)

            a1 = conv_lrelu(x0, g1, w1, b1)                             # (64, 64)
            a2 = conv_lrelu(a1, g2, w2, b2)                             # (64, 16)
            a3 = conv_lrelu(a2, g3, w3, b3)                             # (64, 16) [9 valid]
            a4 = conv_lrelu(a3, g4, w4, b4)                             # (64, 16)

            # Final Cout=1 conv on the VPU/XLU: one multiply + one sublane
            # reduce over the stacked (T*cin, mo) patch.
            cin5 = a4.shape[0]
            ntaps5 = w5.shape[0] // cin5
            mo_pad5 = g5.shape[1] // ntaps5
            shifted5 = jnp.dot(a4, g5[...],
                               preferred_element_type=jnp.float32)      # (64, T*mo_pad5)
            patch5 = jnp.concatenate(
                [shifted5[:, t * mo_pad5:(t + 1) * mo_pad5] for t in range(ntaps5)],
                axis=0)                                                 # (256, mo_pad5)
            y5 = jnp.sum(patch5 * w5[...], axis=0, keepdims=True) + b5[...]
            out_ref[b] = _lrelu(y5)[:, :mo_out]                         # (1, mo_out) lane-dense

    return kernel


# ----------------------------------------------------------------------------
# One-time preparation (hoisted out of the forward path).
# ----------------------------------------------------------------------------
def _stacked_gather_T(h_in, w_in, m_in, kh, kw, stride, pad, mo_pad):
    """0/1 matrix (m_in, kh*kw*mo_pad) s.t. (act @ G)[c, t*mo_pad + m] equals the
    zero-padded input value feeding tap t of output position m."""
    ho = (h_in + 2 * pad - kh) // stride + 1
    wo = (w_in + 2 * pad - kw) // stride + 1
    g = np.zeros((m_in, kh * kw * mo_pad), np.float32)
    for dy in range(kh):
        for dx in range(kw):
            t = dy * kw + dx
            for oy in range(ho):
                iy = oy * stride + dy - pad
                if iy < 0 or iy >= h_in:
                    continue                          # zero-padding row -> stays 0
                for ox in range(wo):
                    ix = ox * stride + dx - pad
                    if 0 <= ix < w_in:
                        g[iy * w_in + ix, t * mo_pad + oy * wo + ox] = 1.0
    return g, ho, wo


def prepare_hnn(params, h, w):
    """Flatten weights/biases and build the stacked per-layer gather matrices."""
    prepped = []
    n_layers = len(params)
    h_in, w_in = h, w
    m_in = h * w                      # lane width of the incoming activation
    for idx, (wt, bv, stride, pad) in enumerate(params):
        wt = np.asarray(wt, np.float32)
        bv = np.asarray(bv, np.float32)
        cout, cin, kh, kw = wt.shape
        ho = (h_in + 2 * pad - kh) // stride + 1
        wo = (w_in + 2 * pad - kw) // stride + 1
        mo_pad = _round_up(ho * wo, 8)
        g, ho, wo = _stacked_gather_T(h_in, w_in, m_in, kh, kw, stride, pad, mo_pad)
        # torch (Cout, Cin, KH, KW) -> stacked (Cout, T*Cin), tap-major K dim.
        w_flat = np.transpose(wt, (0, 2, 3, 1)).reshape(cout, kh * kw * cin)
        if idx == n_layers - 1:
            assert cout == 1, "final layer expected to have a single channel"
            w_flat = w_flat.reshape(kh * kw * cin, 1)     # column for the VPU epilogue
            b_flat = bv.reshape(1, 1)
        else:
            b_flat = bv.reshape(cout, 1)
        prepped.append((jnp.asarray(g), jnp.asarray(w_flat), jnp.asarray(b_flat)))
        h_in, w_in, m_in = ho, wo, mo_pad
    in_channels = int(np.asarray(params[0][0]).shape[1])
    return prepped, (h_in, w_in), (h, w, in_channels)


def _pick_batching(b):
    """Per-step batch Bt: amortize grid-step overhead, but keep >= 2 grid steps
    whenever possible so both v7x TensorCores get work."""
    hi = min(MAX_BT, b // 2) if b > 1 else 1
    bt = 1
    for cand in range(hi, 0, -1):
        if b % cand == 0:
            bt = cand
            break
    return bt, b // bt


def make_hnn_forward(prepped, out_hw, in_meta):
    ho, wo = out_hw
    mo = ho * wo
    h0, w0, cin0 = in_meta

    def fwd(q, p):
        b, cq, h, w = q.shape
        assert q.shape == p.shape, (q.shape, p.shape)
        assert (h, w) == (h0, w0), (
            f"prepare_hnn was built for spatial {(h0, w0)}, got {(h, w)}")
        assert 2 * cq == cin0, (2 * cq, cin0)

        bt, n_steps = _pick_batching(b)

        # Free reshapes of the NCHW tensors -- no concat/transpose glue outside
        # the kernel; the net runs channels-major.
        qf = q.reshape(b, cq, h * w).astype(jnp.float32)
        pf = p.reshape(b, cq, h * w).astype(jnp.float32)

        io_spec = pl.BlockSpec((bt, cq, h * w), lambda i: (i, 0, 0))
        in_specs = [io_spec, io_spec]
        inputs = [qf, pf]
        for (g, wf, bf) in prepped:
            for arr in (g, wf, bf):
                in_specs.append(pl.BlockSpec(arr.shape, lambda i: (0, 0)))
                inputs.append(arr)

        out = pl.pallas_call(
            _make_fused_kernel(bt),
            out_shape=jax.ShapeDtypeStruct((b, 1, mo), jnp.float32),
            grid=(n_steps,),
            in_specs=in_specs,
            out_specs=pl.BlockSpec((bt, 1, mo), lambda i: (i, 0, 0)),
            compiler_params=pltpu.CompilerParams(
                dimension_semantics=("parallel",)),
        )(*inputs)

        energy = out.reshape(b, ho, wo)        # squeeze the (size-1) channel dim
        if ho == 1:                            # torch's second squeeze(dim=1) (only if size 1)
            energy = energy[:, 0, :]
        return energy

    return jax.jit(fwd)


# ----------------------------------------------------------------------------
# Pure-JAX reference (lax.conv) for correctness check
# ----------------------------------------------------------------------------
def hnn_forward_ref(q, p, params):
    x = jnp.concatenate([q, p], axis=1).astype(jnp.float32)
    for (w, b, stride, pad) in params:
        x = jax.lax.conv_general_dilated(
            x, w, (stride, stride), [(pad, pad), (pad, pad)],
            dimension_numbers=("NCHW", "OIHW", "NCHW"))
        x = x + b.reshape(1, -1, 1, 1)
        x = jnp.where(x > 0, x, LRELU_SLOPE * x)
    x = jnp.squeeze(x, axis=1)
    if x.shape[1] == 1:
        x = jnp.squeeze(x, axis=1)
    return x


# ----------------------------------------------------------------------------
# Deterministic parameter init (torch Conv2d default: U(-1/sqrt(fan_in), ...))
# ----------------------------------------------------------------------------
def init_params(key):
    params = []
    for (cout, cin, kh, kw, stride, pad) in LAYER_DEFS:
        key, kw_key, kb_key = jax.random.split(key, 3)
        fan_in = cin * kh * kw
        bound = 1.0 / np.sqrt(fan_in)
        w = jax.random.uniform(kw_key, (cout, cin, kh, kw), jnp.float32,
                               minval=-bound, maxval=bound)
        b = jax.random.uniform(kb_key, (cout,), jnp.float32,
                               minval=-bound, maxval=bound)
        params.append((w, b, stride, pad))
    return params


if __name__ == "__main__":
    key = jax.random.PRNGKey(0)
    k_params, kq, kp = jax.random.split(key, 3)

    params = init_params(k_params)

    # Shapes consistent with the module: 16+16=32 input channels, 8x8 spatial.
    B, C, S = 2, 16, 8
    q = jax.random.normal(kq, (B, C, S, S), jnp.float32)
    p = jax.random.normal(kp, (B, C, S, S), jnp.float32)

    prepped, out_hw, in_meta = prepare_hnn(params, S, S)      # hoisted, done once
    hnn_forward = make_hnn_forward(prepped, out_hw, in_meta)

    out = jax.block_until_ready(hnn_forward(q, p))
    ref = jax.block_until_ready(hnn_forward_ref(q, p, params))
    assert out.shape == ref.shape, (out.shape, ref.shape)
    np.testing.assert_allclose(np.asarray(out), np.asarray(ref),
                               rtol=1e-4, atol=1e-4)

    # Also exercise the multi-element-per-grid-step path (Bt=2, 2 grid steps).
    kq4, kp4 = jax.random.split(jax.random.PRNGKey(1))
    q4 = jax.random.normal(kq4, (4, C, S, S), jnp.float32)
    p4 = jax.random.normal(kp4, (4, C, S, S), jnp.float32)
    out4 = jax.block_until_ready(hnn_forward(q4, p4))
    ref4 = jax.block_until_ready(hnn_forward_ref(q4, p4, params))
    assert out4.shape == ref4.shape, (out4.shape, ref4.shape)
    np.testing.assert_allclose(np.asarray(out4), np.asarray(ref4),
                               rtol=1e-4, atol=1e-4)

    print("KERNEL_OK")
</pallas_src>

<mosaic_0001>
module attributes {stable_mosaic.version = 11 : i64} {
  func.func @kernel(%arg0: i32, %arg1: memref<1x16x64xf32, #tpu.memory_space<vmem>>, %arg2: memref<1x16x64xf32, #tpu.memory_space<vmem>>, %arg3: memref<64x576xf32, #tpu.memory_space<vmem>>, %arg4: memref<64x288xf32, #tpu.memory_space<vmem>>, %arg5: memref<64x1xf32, #tpu.memory_space<vmem>>, %arg6: memref<64x64xf32, #tpu.memory_space<vmem>>, %arg7: memref<64x256xf32, #tpu.memory_space<vmem>>, %arg8: memref<64x1xf32, #tpu.memory_space<vmem>>, %arg9: memref<16x64xf32, #tpu.memory_space<vmem>>, %arg10: memref<64x256xf32, #tpu.memory_space<vmem>>, %arg11: memref<64x1xf32, #tpu.memory_space<vmem>>, %arg12: memref<16x64xf32, #tpu.memory_space<vmem>>, %arg13: memref<64x256xf32, #tpu.memory_space<vmem>>, %arg14: memref<64x1xf32, #tpu.memory_space<vmem>>, %arg15: memref<16x64xf32, #tpu.memory_space<vmem>>, %arg16: memref<256x1xf32, #tpu.memory_space<vmem>>, %arg17: memref<1x1xf32, #tpu.memory_space<vmem>>, %arg18: memref<1x1x9xf32, #tpu.memory_space<vmem>>) attributes {dimension_semantics = [#tpu.dimension_semantics<parallel>], iteration_bounds = array<i64: 2>, scalar_prefetch = 0 : i64, scratch_operands = 0 : i64, tpu.core_type = #tpu.core_type<tc>, window_params = [{transform_indices = @transform_0, window_bounds = array<i64: 1, 16, 64>}, {transform_indices = @transform_1, window_bounds = array<i64: 1, 16, 64>}, {pipeline_mode = #tpu.pipeline_mode<synchronous>, transform_indices = @transform_2, window_bounds = array<i64: 64, 576>}, {pipeline_mode = #tpu.pipeline_mode<synchronous>, transform_indices = @transform_3, window_bounds = array<i64: 64, 288>}, {pipeline_mode = #tpu.pipeline_mode<synchronous>, transform_indices = @transform_4, window_bounds = array<i64: 64, 1>}, {pipeline_mode = #tpu.pipeline_mode<synchronous>, transform_indices = @transform_5, window_bounds = array<i64: 64, 64>}, {pipeline_mode = #tpu.pipeline_mode<synchronous>, transform_indices = @transform_6, window_bounds = array<i64: 64, 256>}, {pipeline_mode = #tpu.pipeline_mode<synchronous>, transform_indices = @transform_7, window_bounds = array<i64: 64, 1>}, {pipeline_mode = #tpu.pipeline_mode<synchronous>, transform_indices = @transform_8, window_bounds = array<i64: 16, 64>}, {pipeline_mode = #tpu.pipeline_mode<synchronous>, transform_indices = @transform_9, window_bounds = array<i64: 64, 256>}, {pipeline_mode = #tpu.pipeline_mode<synchronous>, transform_indices = @transform_10, window_bounds = array<i64: 64, 1>}, {pipeline_mode = #tpu.pipeline_mode<synchronous>, transform_indices = @transform_11, window_bounds = array<i64: 16, 64>}, {pipeline_mode = #tpu.pipeline_mode<synchronous>, transform_indices = @transform_12, window_bounds = array<i64: 64, 256>}, {pipeline_mode = #tpu.pipeline_mode<synchronous>, transform_indices = @transform_13, window_bounds = array<i64: 64, 1>}, {pipeline_mode = #tpu.pipeline_mode<synchronous>, transform_indices = @transform_14, window_bounds = array<i64: 16, 64>}, {pipeline_mode = #tpu.pipeline_mode<synchronous>, transform_indices = @transform_15, window_bounds = array<i64: 256, 1>}, {pipeline_mode = #tpu.pipeline_mode<synchronous>, transform_indices = @transform_16, window_bounds = array<i64: 1, 1>}, {transform_indices = @transform_17, window_bounds = array<i64: 1, 1, 9>}]} {
    %c0 = arith.constant 0 : index
    %c0_0 = arith.constant 0 : index
    %c0_1 = arith.constant 0 : index
    %0 = vector.load %arg1[%c0, %c0_0, %c0_1] : memref<1x16x64xf32, #tpu.memory_space<vmem>>, vector<1x16x64xf32>
    %1 = vector.shape_cast %0 : vector<1x16x64xf32> to vector<16x64xf32>
    %c0_2 = arith.constant 0 : index
    %c0_3 = arith.constant 0 : index
    %c0_4 = arith.constant 0 : index
    %2 = vector.load %arg2[%c0_2, %c0_3, %c0_4] : memref<1x16x64xf32, #tpu.memory_space<vmem>>, vector<1x16x64xf32>
    %3 = vector.shape_cast %2 : vector<1x16x64xf32> to vector<16x64xf32>
    %4 = tpu.concatenate %1, %3 in 0 : vector<16x64xf32>, vector<16x64xf32> -> vector<32x64xf32>
    %c0_5 = arith.constant 0 : index
    %c0_6 = arith.constant 0 : index
    %5 = vector.load %arg3[%c0_5, %c0_6] : memref<64x576xf32, #tpu.memory_space<vmem>>, vector<64x576xf32>
    %cst = arith.constant dense<0.000000e+00> : vector<32x576xf32>
    %6 = tpu.matmul %4, %5, %cst {dimension_numbers = #tpu.dot_dimension_numbers<[1], [0], [0], [1], [0, 0, 1, 1], [], []>} : vector<32x64xf32>, vector<64x576xf32>, vector<32x576xf32> -> vector<32x576xf32>
    %7 = vector.extract_strided_slice %6 {offsets = [0, 0], sizes = [32, 64], strides = [1, 1]} : vector<32x576xf32> to vector<32x64xf32>
    %8 = vector.extract_strided_slice %6 {offsets = [0, 64], sizes = [32, 64], strides = [1, 1]} : vector<32x576xf32> to vector<32x64xf32>
    %9 = vector.extract_strided_slice %6 {offsets = [0, 128], sizes = [32, 64], strides = [1, 1]} : vector<32x576xf32> to vector<32x64xf32>
    %10 = vector.extract_strided_slice %6 {offsets = [0, 192], sizes = [32, 64], strides = [1, 1]} : vector<32x576xf32> to vector<32x64xf32>
    %11 = vector.extract_strided_slice %6 {offsets = [0, 256], sizes = [32, 64], strides = [1, 1]} : vector<32x576xf32> to vector<32x64xf32>
    %12 = vector.extract_strided_slice %6 {offsets = [0, 320], sizes = [32, 64], strides = [1, 1]} : vector<32x576xf32> to vector<32x64xf32>
    %13 = vector.extract_strided_slice %6 {offsets = [0, 384], sizes = [32, 64], strides = [1, 1]} : vector<32x576xf32> to vector<32x64xf32>
    %14 = vector.extract_strided_slice %6 {offsets = [0, 448], sizes = [32, 64], strides = [1, 1]} : vector<32x576xf32> to vector<32x64xf32>
    %15 = vector.extract_strided_slice %6 {offsets = [0, 512], sizes = [32, 64], strides = [1, 1]} : vector<32x576xf32> to vector<32x64xf32>
    %16 = tpu.concatenate %7, %8, %9, %10, %11, %12, %13, %14, %15 in 0 : vector<32x64xf32>, vector<32x64xf32>, vector<32x64xf32>, vector<32x64xf32>, vector<32x64xf32>, vector<32x64xf32>, vector<32x64xf32>, vector<32x64xf32>, vector<32x64xf32> -> vector<288x64xf32>
    %c0_7 = arith.constant 0 : index
    %c0_8 = arith.constant 0 : index
    %17 = vector.load %arg4[%c0_7, %c0_8] : memref<64x288xf32, #tpu.memory_space<vmem>>, vector<64x288xf32>
    %cst_9 = arith.constant dense<0.000000e+00> : vector<64x64xf32>
    %18 = tpu.matmul %17, %16, %cst_9 {dimension_numbers = #tpu.dot_dimension_numbers<[1], [0], [0], [1], [0, 0, 1, 1], [], []>} : vector<64x288xf32>, vector<288x64xf32>, vector<64x64xf32> -> vector<64x64xf32>
    %c0_10 = arith.constant 0 : index
    %c0_11 = arith.constant 0 : index
    %19 = vector.load %arg5[%c0_10, %c0_11] : memref<64x1xf32, #tpu.memory_space<vmem>>, vector<64x1xf32>
    %20 = vector.broadcast %19 : vector<64x1xf32> to vector<64x64xf32>
    %21 = arith.addf %18, %20 : vector<64x64xf32>
    %cst_12 = arith.constant 0.000000e+00 : f32
    %22 = vector.broadcast %cst_12 : f32 to vector<64x64xf32>
    %23 = arith.cmpf ogt, %21, %22 : vector<64x64xf32>
    %cst_13 = arith.constant 1.000000e-01 : f32
    %24 = vector.broadcast %cst_13 : f32 to vector<64x64xf32>
    %25 = arith.mulf %24, %21 : vector<64x64xf32>
    %26 = arith.select %23, %21, %25 : vector<64x64xi1>, vector<64x64xf32>
    %c0_14 = arith.constant 0 : index
    %c0_15 = arith.constant 0 : index
    %27 = vector.load %arg6[%c0_14, %c0_15] : memref<64x64xf32, #tpu.memory_space<vmem>>, vector<64x64xf32>
    %cst_16 = arith.constant dense<0.000000e+00> : vector<64x64xf32>
    %28 = tpu.matmul %26, %27, %cst_16 {dimension_numbers = #tpu.dot_dimension_numbers<[1], [0], [0], [1], [0, 0, 1, 1], [], []>} : vector<64x64xf32>, vector<64x64xf32>, vector<64x64xf32> -> vector<64x64xf32>
    %29 = vector.extract_strided_slice %28 {offsets = [0, 0], sizes = [64, 16], strides = [1, 1]} : vector<64x64xf32> to vector<64x16xf32>
    %30 = vector.extract_strided_slice %28 {offsets = [0, 16], sizes = [64, 16], strides = [1, 1]} : vector<64x64xf32> to vector<64x16xf32>
    %31 = vector.extract_strided_slice %28 {offsets = [0, 32], sizes = [64, 16], strides = [1, 1]} : vector<64x64xf32> to vector<64x16xf32>
    %32 = vector.extract_strided_slice %28 {offsets = [0, 48], sizes = [64, 16], strides = [1, 1]} : vector<64x64xf32> to vector<64x16xf32>
    %33 = tpu.concatenate %29, %30, %31, %32 in 0 : vector<64x16xf32>, vector<64x16xf32>, vector<64x16xf32>, vector<64x16xf32> -> vector<256x16xf32>
    %c0_17 = arith.constant 0 : index
    %c0_18 = arith.constant 0 : index
    %34 = vector.load %arg7[%c0_17, %c0_18] : memref<64x256xf32, #tpu.memory_space<vmem>>, vector<64x256xf32>
    %cst_19 = arith.constant dense<0.000000e+00> : vector<64x16xf32>
    %35 = tpu.matmul %34, %33, %cst_19 {dimension_numbers = #tpu.dot_dimension_numbers<[1], [0], [0], [1], [0, 0, 1, 1], [], []>} : vector<64x256xf32>, vector<256x16xf32>, vector<64x16xf32> -> vector<64x16xf32>
    %c0_20 = arith.constant 0 : index
    %c0_21 = arith.constant 0 : index
    %36 = vector.load %arg8[%c0_20, %c0_21] : memref<64x1xf32, #tpu.memory_space<vmem>>, vector<64x1xf32>
    %37 = vector.broadcast %36 : vector<64x1xf32> to vector<64x16xf32>
    %38 = arith.addf %35, %37 : vector<64x16xf32>
    %cst_22 = arith.constant 0.000000e+00 : f32
    %39 = vector.broadcast %cst_22 : f32 to vector<64x16xf32>
    %40 = arith.cmpf ogt, %38, %39 : vector<64x16xf32>
    %cst_23 = arith.constant 1.000000e-01 : f32
    %41 = vector.broadcast %cst_23 : f32 to vector<64x16xf32>
    %42 = arith.mulf %41, %38 : vector<64x16xf32>
    %43 = arith.select %40, %38, %42 : vector<64x16xi1>, vector<64x16xf32>
    %c0_24 = arith.constant 0 : index
    %c0_25 = arith.constant 0 : index
    %44 = vector.load %arg9[%c0_24, %c0_25] : memref<16x64xf32, #tpu.memory_space<vmem>>, vector<16x64xf32>
    %cst_26 = arith.constant dense<0.000000e+00> : vector<64x64xf32>
    %45 = tpu.matmul %43, %44, %cst_26 {dimension_numbers = #tpu.dot_dimension_numbers<[1], [0], [0], [1], [0, 0, 1, 1], [], []>} : vector<64x16xf32>, vector<16x64xf32>, vector<64x64xf32> -> vector<64x64xf32>
    %46 = vector.extract_strided_slice %45 {offsets = [0, 0], sizes = [64, 16], strides = [1, 1]} : vector<64x64xf32> to vector<64x16xf32>
    %47 = vector.extract_strided_slice %45 {offsets = [0, 16], sizes = [64, 16], strides = [1, 1]} : vector<64x64xf32> to vector<64x16xf32>
    %48 = vector.extract_strided_slice %45 {offsets = [0, 32], sizes = [64, 16], strides = [1, 1]} : vector<64x64xf32> to vector<64x16xf32>
    %49 = vector.extract_strided_slice %45 {offsets = [0, 48], sizes = [64, 16], strides = [1, 1]} : vector<64x64xf32> to vector<64x16xf32>
    %50 = tpu.concatenate %46, %47, %48, %49 in 0 : vector<64x16xf32>, vector<64x16xf32>, vector<64x16xf32>, vector<64x16xf32> -> vector<256x16xf32>
    %c0_27 = arith.constant 0 : index
    %c0_28 = arith.constant 0 : index
    %51 = vector.load %arg10[%c0_27, %c0_28] : memref<64x256xf32, #tpu.memory_space<vmem>>, vector<64x256xf32>
    %cst_29 = arith.constant dense<0.000000e+00> : vector<64x16xf32>
    %52 = tpu.matmul %51, %50, %cst_29 {dimension_numbers = #tpu.dot_dimension_numbers<[1], [0], [0], [1], [0, 0, 1, 1], [], []>} : vector<64x256xf32>, vector<256x16xf32>, vector<64x16xf32> -> vector<64x16xf32>
    %c0_30 = arith.constant 0 : index
    %c0_31 = arith.constant 0 : index
    %53 = vector.load %arg11[%c0_30, %c0_31] : memref<64x1xf32, #tpu.memory_space<vmem>>, vector<64x1xf32>
    %54 = vector.broadcast %53 : vector<64x1xf32> to vector<64x16xf32>
    %55 = arith.addf %52, %54 : vector<64x16xf32>
    %cst_32 = arith.constant 0.000000e+00 : f32
    %56 = vector.broadcast %cst_32 : f32 to vector<64x16xf32>
    %57 = arith.cmpf ogt, %55, %56 : vector<64x16xf32>
    %cst_33 = arith.constant 1.000000e-01 : f32
    %58 = vector.broadcast %cst_33 : f32 to vector<64x16xf32>
    %59 = arith.mulf %58, %55 : vector<64x16xf32>
    %60 = arith.select %57, %55, %59 : vector<64x16xi1>, vector<64x16xf32>
    %c0_34 = arith.constant 0 : index
    %c0_35 = arith.constant 0 : index
    %61 = vector.load %arg12[%c0_34, %c0_35] : memref<16x64xf32, #tpu.memory_space<vmem>>, vector<16x64xf32>
    %cst_36 = arith.constant dense<0.000000e+00> : vector<64x64xf32>
    %62 = tpu.matmul %60, %61, %cst_36 {dimension_numbers = #tpu.dot_dimension_numbers<[1], [0], [0], [1], [0, 0, 1, 1], [], []>} : vector<64x16xf32>, vector<16x64xf32>, vector<64x64xf32> -> vector<64x64xf32>
    %63 = vector.extract_strided_slice %62 {offsets = [0, 0], sizes = [64, 16], strides = [1, 1]} : vector<64x64xf32> to vector<64x16xf32>
    %64 = vector.extract_strided_slice %62 {offsets = [0, 16], sizes = [64, 16], strides = [1, 1]} : vector<64x64xf32> to vector<64x16xf32>
    %65 = vector.extract_strided_slice %62 {offsets = [0, 32], sizes = [64, 16], strides = [1, 1]} : vector<64x64xf32> to vector<64x16xf32>
    %66 = vector.extract_strided_slice %62 {offsets = [0, 48], sizes = [64, 16], strides = [1, 1]} : vector<64x64xf32> to vector<64x16xf32>
    %67 = tpu.concatenate %63, %64, %65, %66 in 0 : vector<64x16xf32>, vector<64x16xf32>, vector<64x16xf32>, vector<64x16xf32> -> vector<256x16xf32>
    %c0_37 = arith.constant 0 : index
    %c0_38 = arith.constant 0 : index
    %68 = vector.load %arg13[%c0_37, %c0_38] : memref<64x256xf32, #tpu.memory_space<vmem>>, vector<64x256xf32>
    %cst_39 = arith.constant dense<0.000000e+00> : vector<64x16xf32>
    %69 = tpu.matmul %68, %67, %cst_39 {dimension_numbers = #tpu.dot_dimension_numbers<[1], [0], [0], [1], [0, 0, 1, 1], [], []>} : vector<64x256xf32>, vector<256x16xf32>, vector<64x16xf32> -> vector<64x16xf32>
    %c0_40 = arith.constant 0 : index
    %c0_41 = arith.constant 0 : index
    %70 = vector.load %arg14[%c0_40, %c0_41] : memref<64x1xf32, #tpu.memory_space<vmem>>, vector<64x1xf32>
    %71 = vector.broadcast %70 : vector<64x1xf32> to vector<64x16xf32>
    %72 = arith.addf %69, %71 : vector<64x16xf32>
    %cst_42 = arith.constant 0.000000e+00 : f32
    %73 = vector.broadcast %cst_42 : f32 to vector<64x16xf32>
    %74 = arith.cmpf ogt, %72, %73 : vector<64x16xf32>
    %cst_43 = arith.constant 1.000000e-01 : f32
    %75 = vector.broadcast %cst_43 : f32 to vector<64x16xf32>
    %76 = arith.mulf %75, %72 : vector<64x16xf32>
    %77 = arith.select %74, %72, %76 : vector<64x16xi1>, vector<64x16xf32>
    %c0_44 = arith.constant 0 : index
    %c0_45 = arith.constant 0 : index
    %78 = vector.load %arg15[%c0_44, %c0_45] : memref<16x64xf32, #tpu.memory_space<vmem>>, vector<16x64xf32>
    %cst_46 = arith.constant dense<0.000000e+00> : vector<64x64xf32>
    %79 = tpu.matmul %77, %78, %cst_46 {dimension_numbers = #tpu.dot_dimension_numbers<[1], [0], [0], [1], [0, 0, 1, 1], [], []>} : vector<64x16xf32>, vector<16x64xf32>, vector<64x64xf32> -> vector<64x64xf32>
    %80 = vector.extract_strided_slice %79 {offsets = [0, 0], sizes = [64, 16], strides = [1, 1]} : vector<64x64xf32> to vector<64x16xf32>
    %81 = vector.extract_strided_slice %79 {offsets = [0, 16], sizes = [64, 16], strides = [1, 1]} : vector<64x64xf32> to vector<64x16xf32>
    %82 = vector.extract_strided_slice %79 {offsets = [0, 32], sizes = [64, 16], strides = [1, 1]} : vector<64x64xf32> to vector<64x16xf32>
    %83 = vector.extract_strided_slice %79 {offsets = [0, 48], sizes = [64, 16], strides = [1, 1]} : vector<64x64xf32> to vector<64x16xf32>
    %84 = tpu.concatenate %80, %81, %82, %83 in 0 : vector<64x16xf32>, vector<64x16xf32>, vector<64x16xf32>, vector<64x16xf32> -> vector<256x16xf32>
    %c0_47 = arith.constant 0 : index
    %c0_48 = arith.constant 0 : index
    %85 = vector.load %arg16[%c0_47, %c0_48] : memref<256x1xf32, #tpu.memory_space<vmem>>, vector<256x1xf32>
    %86 = vector.broadcast %85 : vector<256x1xf32> to vector<256x16xf32>
    %87 = arith.mulf %84, %86 : vector<256x16xf32>
    %cst_49 = arith.constant dense<0.000000e+00> : vector<16xf32>
    %88 = vector.multi_reduction <add>, %87, %cst_49 [0] : vector<256x16xf32> to vector<16xf32>
    %89 = vector.shape_cast %88 : vector<16xf32> to vector<1x16xf32>
    %c0_50 = arith.constant 0 : index
    %c0_51 = arith.constant 0 : index
    %90 = vector.load %arg17[%c0_50, %c0_51] : memref<1x1xf32, #tpu.memory_space<vmem>>, vector<1x1xf32>
    %91 = vector.broadcast %90 : vector<1x1xf32> to vector<1x16xf32>
    %92 = arith.addf %89, %91 : vector<1x16xf32>
    %cst_52 = arith.constant 0.000000e+00 : f32
    %93 = vector.broadcast %cst_52 : f32 to vector<1x16xf32>
    %94 = arith.cmpf ogt, %92, %93 : vector<1x16xf32>
    %cst_53 = arith.constant 1.000000e-01 : f32
    %95 = vector.broadcast %cst_53 : f32 to vector<1x16xf32>
    %96 = arith.mulf %95, %92 : vector<1x16xf32>
    %97 = arith.select %94, %92, %96 : vector<1x16xi1>, vector<1x16xf32>
    %98 = vector.extract_strided_slice %97 {offsets = [0, 0], sizes = [1, 9], strides = [1, 1]} : vector<1x16xf32> to vector<1x9xf32>
    %c0_54 = arith.constant 0 : index
    %c0_55 = arith.constant 0 : index
    %c0_56 = arith.constant 0 : index
    %99 = vector.load %arg18[%c0_54, %c0_55, %c0_56] : memref<1x1x9xf32, #tpu.memory_space<vmem>>, vector<1x1x9xf32>
    %100 = vector.shape_cast %99 : vector<1x1x9xf32> to vector<1x9xf32>
    %101 = vector.shape_cast %98 : vector<1x9xf32> to vector<1x1x9xf32>
    tpu.vector_store %arg18[%c0_54, %c0_55, %c0_56], %101 {strides = array<i32>} : memref<1x1x9xf32, #tpu.memory_space<vmem>>, vector<1x1x9xf32>,
    return
  }
  func.func @transform_0(%arg0: i32) -> (i32, i32, i32) {
    %c0_i32 = arith.constant 0 : i32
    %c0_i32_0 = arith.constant 0 : i32
    %c0_i32_1 = arith.constant 0 : i32
    return %arg0, %c0_i32, %c0_i32_0 : i32, i32, i32
  }
  func.func @transform_1(%arg0: i32) -> (i32, i32, i32) {
    %c0_i32 = arith.constant 0 : i32
    %c0_i32_0 = arith.constant 0 : i32
    %c0_i32_1 = arith.constant 0 : i32
    return %arg0, %c0_i32, %c0_i32_0 : i32, i32, i32
  }
  func.func @transform_2(%arg0: i32) -> (i32, i32) {
    %c0_i32 = arith.constant 0 : i32
    %c0_i32_0 = arith.constant 0 : i32
    %c0_i32_1 = arith.constant 0 : i32
    return %c0_i32, %c0_i32_0 : i32, i32
  }
  func.func @transform_3(%arg0: i32) -> (i32, i32) {
    %c0_i32 = arith.constant 0 : i32
    %c0_i32_0 = arith.constant 0 : i32
    %c0_i32_1 = arith.constant 0 : i32
    return %c0_i32, %c0_i32_0 : i32, i32
  }
  func.func @transform_4(%arg0: i32) -> (i32, i32) {
    %c0_i32 = arith.constant 0 : i32
    %c0_i32_0 = arith.constant 0 : i32
    %c0_i32_1 = arith.constant 0 : i32
    return %c0_i32, %c0_i32_0 : i32, i32
  }
  func.func @transform_5(%arg0: i32) -> (i32, i32) {
    %c0_i32 = arith.constant 0 : i32
    %c0_i32_0 = arith.constant 0 : i32
    %c0_i32_1 = arith.constant 0 : i32
    return %c0_i32, %c0_i32_0 : i32, i32
  }
  func.func @transform_6(%arg0: i32) -> (i32, i32) {
    %c0_i32 = arith.constant 0 : i32
    %c0_i32_0 = arith.constant 0 : i32
    %c0_i32_1 = arith.constant 0 : i32
    return %c0_i32, %c0_i32_0 : i32, i32
  }
  func.func @transform_7(%arg0: i32) -> (i32, i32) {
    %c0_i32 = arith.constant 0 : i32
    %c0_i32_0 = arith.constant 0 : i32
    %c0_i32_1 = arith.constant 0 : i32
    return %c0_i32, %c0_i32_0 : i32, i32
  }
  func.func @transform_8(%arg0: i32) -> (i32, i32) {
    %c0_i32 = arith.constant 0 : i32
    %c0_i32_0 = arith.constant 0 : i32
    %c0_i32_1 = arith.constant 0 : i32
    return %c0_i32, %c0_i32_0 : i32, i32
  }
  func.func @transform_9(%arg0: i32) -> (i32, i32) {
    %c0_i32 = arith.constant 0 : i32
    %c0_i32_0 = arith.constant 0 : i32
    %c0_i32_1 = arith.constant 0 : i32
    return %c0_i32, %c0_i32_0 : i32, i32
  }
  func.func @transform_10(%arg0: i32) -> (i32, i32) {
    %c0_i32 = arith.constant 0 : i32
    %c0_i32_0 = arith.constant 0 : i32
    %c0_i32_1 = arith.constant 0 : i32
    return %c0_i32, %c0_i32_0 : i32, i32
  }
  func.func @transform_11(%arg0: i32) -> (i32, i32) {
    %c0_i32 = arith.constant 0 : i32
    %c0_i32_0 = arith.constant 0 : i32
    %c0_i32_1 = arith.constant 0 : i32
    return %c0_i32, %c0_i32_0 : i32, i32
  }
  func.func @transform_12(%arg0: i32) -> (i32, i32) {
    %c0_i32 = arith.constant 0 : i32
    %c0_i32_0 = arith.constant 0 : i32
    %c0_i32_1 = arith.constant 0 : i32
    return %c0_i32, %c0_i32_0 : i32, i32
  }
  func.func @transform_13(%arg0: i32) -> (i32, i32) {
    %c0_i32 = arith.constant 0 : i32
    %c0_i32_0 = arith.constant 0 : i32
    %c0_i32_1 = arith.constant 0 : i32
    return %c0_i32, %c0_i32_0 : i32, i32
  }
  func.func @transform_14(%arg0: i32) -> (i32, i32) {
    %c0_i32 = arith.constant 0 : i32
    %c0_i32_0 = arith.constant 0 : i32
    %c0_i32_1 = arith.constant 0 : i32
    return %c0_i32, %c0_i32_0 : i32, i32
  }
  func.func @transform_15(%arg0: i32) -> (i32, i32) {
    %c0_i32 = arith.constant 0 : i32
    %c0_i32_0 = arith.constant 0 : i32
    %c0_i32_1 = arith.constant 0 : i32
    return %c0_i32, %c0_i32_0 : i32, i32
  }
  func.func @transform_16(%arg0: i32) -> (i32, i32) {
    %c0_i32 = arith.constant 0 : i32
    %c0_i32_0 = arith.constant 0 : i32
    %c0_i32_1 = arith.constant 0 : i32
    return %c0_i32, %c0_i32_0 : i32, i32
  }
  func.func @transform_17(%arg0: i32) -> (i32, i32, i32) {
    %c0_i32 = arith.constant 0 : i32
    %c0_i32_0 = arith.constant 0 : i32
    %c0_i32_1 = arith.constant 0 : i32
    return %arg0, %c0_i32, %c0_i32_0 : i32, i32, i32
  }
}

</mosaic_0001>

<llo_original>
// kernel: fwd.1
$region0: #{fwd.1}
  #allocation0 [shape = 'u32[]', space=smem, size = 0x4, offset = 0x4, fixed_abs, tag = 'smem constant byte address 0x4 - core index']
  #allocation1 [shape = 'u32[72,128]{1,0:T(1,128)}', space=vmem, size = 0x9000, scoped, tag = 'internal scratch']
  #allocation2 [shape = 'f32[1,1]{1,0:T(1,128)S(1)}', space=vmem, size = 0x200, scoped, tag = 'scoped memory for fwd.1']
  %s0 = inlined_call_operand.vmem [shape: f32[2,16,64], index: 0, kind: input, shape index: {}]
  %s1 = inlined_call_operand.vmem [shape: f32[2,16,64], index: 1, kind: input, shape index: {}]
  %s2 = inlined_call_operand.hbm [shape: f32[64,576], index: 2, kind: input, shape index: {}]
  %s3 = inlined_call_operand.vmem [shape: f32[64,288], index: 3, kind: input, shape index: {}]
  %s4 = inlined_call_operand.hbm [shape: f32[64,1], index: 4, kind: input, shape index: {}]
  %s5 = inlined_call_operand.hbm [shape: f32[64,64], index: 5, kind: input, shape index: {}]
  %s6 = inlined_call_operand.hbm [shape: f32[64,256], index: 6, kind: input, shape index: {}]
  %s7 = inlined_call_operand.hbm [shape: f32[64,1], index: 7, kind: input, shape index: {}]
  %s8 = inlined_call_operand.hbm [shape: f32[16,64], index: 8, kind: input, shape index: {}, may-alias: {8,14}]
  %s9 = inlined_call_operand.hbm [shape: f32[64,256], index: 9, kind: input, shape index: {}]
  %s10 = inlined_call_operand.hbm [shape: f32[64,1], index: 10, kind: input, shape index: {}]
  %s11 = inlined_call_operand.hbm [shape: f32[16,64], index: 11, kind: input, shape index: {}]
  %s12 = inlined_call_operand.hbm [shape: f32[64,256], index: 12, kind: input, shape index: {}]
  %s13 = inlined_call_operand.hbm [shape: f32[64,1], index: 13, kind: input, shape index: {}]
  %s14 = inlined_call_operand.hbm [shape: f32[16,64], index: 14, kind: input, shape index: {}, may-alias: {8,14}]
  %s15 = inlined_call_operand.hbm [shape: f32[256,1], index: 15, kind: input, shape index: {}]
  %s16 = inlined_call_operand.<no memory space> [shape: f32[1,1], index: 16, kind: input, shape index: {}]
  %s17 = inlined_call_operand.vmem [shape: f32[2,1,9], index: 17, kind: output, shape index: {}]
  %s18 = sld [smem:[#allocation0]]
  $region153: #{fwd.1} parent=0
    _
  %s20 = ssub.s32 1, %s18
  %s21 = scalar_select 0, %s20, %s18
  %v22 = vstv %s16
  %23 = vst [vmem:[#allocation2] sm:$0x1] %v22
  $region1: #{fwd.1} parent=0
    #allocation3 [shape = 'u8[163840]{0}', space=vmem, size = 0x28000, scoped, tag = 'input window, operand 2, single buffered']
    #allocation4 [shape = 's32[2]{0}', space=sflag, size = 0x8, scoped, tag = 'scoped memory for fwd.1']
    #allocation5 [shape = 'u8[32768]{0}', space=vmem, size = 0x8000, scoped, tag = 'input window, operand 4, single buffered']
    #allocation6 [shape = 's32[1]{0}', space=sflag, size = 0x4, scoped, tag = 'scoped memory for fwd.1']
    #allocation7 [shape = 'u8[32768]{0}', space=vmem, size = 0x8000, scoped, tag = 'input window, operand 5, single buffered']
    #allocation8 [shape = 'u8[65536]{0}', space=vmem, size = 0x10000, scoped, tag = 'input window, operand 6, single buffered']
    #allocation9 [shape = 's32[1]{0}', space=sflag, size = 0x4, scoped, tag = 'scoped memory for fwd.1']
    #allocation10 [shape = 'u8[32768]{0}', space=vmem, size = 0x8000, scoped, tag = 'input window, operand 7, single buffered']
    #allocation11 [shape = 'u8[8192]{0}', space=vmem, size = 0x2000, scoped, tag = 'input window, operand 8, single buffered']
    #allocation12 [shape = 's32[1]{0}', space=sflag, size = 0x4, scoped, tag = 'scoped memory for fwd.1']
    #allocation13 [shape = 'u8[65536]{0}', space=vmem, size = 0x10000, scoped, tag = 'input window, operand 9, single buffered']
    #allocation14 [shape = 'u8[32768]{0}', space=vmem, size = 0x8000, scoped, tag = 'input window, operand 10, single buffered']
    #allocation15 [shape = 's32[1]{0}', space=sflag, size = 0x4, scoped, tag = 'scoped memory for fwd.1']
    #allocation16 [shape = 'u8[8192]{0}', space=vmem, size = 0x2000, scoped, tag = 'input window, operand 11, single buffered']
    #allocation17 [shape = 'u8[65536]{0}', space=vmem, size = 0x10000, scoped, tag = 'input window, operand 12, single buffered']
    #allocation18 [shape = 's32[1]{0}', space=sflag, size = 0x4, scoped, tag = 'scoped memory for fwd.1']
    #allocation19 [shape = 'u8[32768]{0}', space=vmem, size = 0x8000, scoped, tag = 'input window, operand 13, single buffered']
    #allocation20 [shape = 'u8[8192]{0}', space=vmem, size = 0x2000, scoped, tag = 'input window, operand 14, single buffered']
    #allocation21 [shape = 's32[1]{0}', space=sflag, size = 0x4, scoped, tag = 'scoped memory for fwd.1']
    #allocation22 [shape = 'u8[131072]{0}', space=vmem, size = 0x20000, scoped, tag = 'input window, operand 15, single buffered']
    %24 = vsyncpa [#allocation4], 0
    %25 = vsyncpa [#allocation6], 0
    %26 = vsyncpa [#allocation9], 0
    %27 = vsyncpa [#allocation12], 0
    %28 = vsyncpa [#allocation15], 0
    %29 = vsyncpa [#allocation18], 0
    %30 = vsyncpa [#allocation21], 0
    loop: start=0, step=1, limit=4
    $region2: #{fwd.1} parent=1 // loop_pre_header
      _
    $region3: #{fwd.1} parent=1 // loop_header
      %s32 = sphi 0, %s36
      %p33 = scmp.ge.s32.totalorder %s32, 4
      %s42 = sphi 0, %s44
      %s45 = sphi 0, %s42
      %s46 = sphi 0, %s45
      %s62 = sphi 0, %s46
      %s68 = sphi 0, %s70
      %s71 = sphi 0, %s68
      %s72 = sphi 0, %s71
      %s88 = sphi 0, %s72
      %s92 = sphi 0, %s92
      %s94 = sphi 0, %s92
      %s95 = sphi 0, %s94
      %s109 = sphi 0, %s95
      %s113 = sphi 0, %s113
      %s115 = sphi 0, %s113
      %s116 = sphi 0, %s115
      %s130 = sphi 0, %s116
      %s134 = sphi 0, %s134
      %s136 = sphi 0, %s134
      %s137 = sphi 0, %s136
      %s151 = sphi 0, %s137
      %s155 = sphi 0, %s155
      %s157 = sphi 0, %s155
      %s158 = sphi 0, %s157
      %s172 = sphi 0, %s158
      %s176 = sphi 0, %s176
      %s178 = sphi 0, %s176
      %s179 = sphi 0, %s178
      %s193 = sphi 0, %s179
      %s197 = sphi 0, %s197
      %s199 = sphi 0, %s197
      %s200 = sphi 0, %s199
      %s214 = sphi 0, %s200
      %s218 = sphi 0, %s218
      %s220 = sphi 0, %s218
      %s221 = sphi 0, %s220
      %s235 = sphi 0, %s221
      %s239 = sphi 0, %s239
      %s241 = sphi 0, %s239
      %s242 = sphi 0, %s241
      %s256 = sphi 0, %s242
      %s260 = sphi 0, %s260
      %s262 = sphi 0, %s260
      %s263 = sphi 0, %s262
      %s277 = sphi 0, %s263
      %s281 = sphi 0, %s281
      %s283 = sphi 0, %s281
      %s284 = sphi 0, %s283
      %s298 = sphi 0, %s284
      %s302 = sphi 0, %s302
      %s304 = sphi 0, %s302
      %s305 = sphi 0, %s304
      %s319 = sphi 0, %s305
      %s323 = sphi 0, %s323
      %s325 = sphi 0, %s323
      %s326 = sphi 0, %s325
      %s340 = sphi 0, %s326
      %s344 = sphi 0, %s344
      %s346 = sphi 0, %s344
      %s347 = sphi 0, %s346
      %s361 = sphi 0, %s347
      %s365 = sphi 0, %s365
      %s367 = sphi 0, %s365
      %s368 = sphi 0, %s367
      %s382 = sphi 0, %s368
      %s386 = sphi 0, %s386
      %s388 = sphi 0, %s386
      %s389 = sphi 0, %s388
      %s403 = sphi 0, %s389
      %s409 = sphi 0, %s411
      %s412 = sphi 0, %s409
      %s413 = sphi 0, %s412
      %s429 = sphi 0, %s413
    $region4: #{fwd.1} parent=1 // loop_header_branch
      %35 = sbr.rel (%p33) target = $region8
    $region5: #{fwd.1} parent=1 // loop_body
      %s37 = ssub.s32 %s32, 1
      %s38 = ssub.s32 %s32, 2
      %s39 = sadd.s32 %s32, 1
      %s40 = ssub.s32 %s32, %s39
      %p41 = scmp.eq.s32.totalorder %s40, 0
      %s43 = sadd.s32 %s42, 1
      %s44 = scalar_select %p41, %s42, %s43
      %p47 = pneg %p41
      %p48 = scmp.eq.s32.totalorder %s32, 1
      %p49 = por %p47, %p48
      %p50 = scmp.ne.s32.totalorder %s42, %s45
      %p51 = scmp.eq.s32.totalorder %s32, 0
      %p52 = por %p50, %p51
      %p53 = scmp.ne.s32.totalorder %s42, %s45
      %p54 = scmp.eq.s32.totalorder %s37, 1
      %p55 = por %p53, %p54
      %p56 = scmp.ne.s32.totalorder %s45, %s46
      %p57 = scmp.eq.s32.totalorder %s37, 0
      %p58 = por %p56, %p57
      %p59 = scmp.ne.s32.totalorder %s45, %s46
      %p60 = scmp.eq.s32.totalorder %s38, 1
      %p61 = por %p59, %p60
      %p63 = scmp.ne.s32.totalorder %s46, %s62
      %p64 = scmp.eq.s32.totalorder %s38, 0
      %p65 = por %p63, %p64
      %s66 = ssub.s32 %s32, %s39
      %p67 = scmp.eq.s32.totalorder %s66, 0
      %s69 = sadd.s32 %s68, 1
      %s70 = scalar_select %p67, %s68, %s69
      %p73 = pneg %p67
      %p74 = scmp.eq.s32.totalorder %s32, 1
      %p75 = por %p73, %p74
      %p76 = scmp.ne.s32.totalorder %s68, %s71
      %p77 = scmp.eq.s32.totalorder %s32, 0
      %p78 = por %p76, %p77
      %p79 = scmp.ne.s32.totalorder %s68, %s71
      %p80 = scmp.eq.s32.totalorder %s37, 1
      %p81 = por %p79, %p80
      %p82 = scmp.ne.s32.totalorder %s71, %s72
      %p83 = scmp.eq.s32.totalorder %s37, 0
      %p84 = por %p82, %p83
      %p85 = scmp.ne.s32.totalorder %s71, %s72
      %p86 = scmp.eq.s32.totalorder %s38, 1
      %p87 = por %p85, %p86
      %p89 = scmp.ne.s32.totalorder %s72, %s88
      %p90 = scmp.eq.s32.totalorder %s38, 0
      %p91 = por %p89, %p90
      %s93 = sadd.s32 %s92, 1
      %p96 = scmp.eq.s32.totalorder %s32, 1
      %p97 = scmp.ne.s32.totalorder %s92, %s94
      %p98 = scmp.eq.s32.totalorder %s32, 0
      %p99 = por %p97, %p98
      %p100 = scmp.ne.s32.totalorder %s92, %s94
      %p101 = scmp.eq.s32.totalorder %s37, 1
      %p102 = por %p100, %p101
      %p103 = scmp.ne.s32.totalorder %s94, %s95
      %p104 = scmp.eq.s32.totalorder %s37, 0
      %p105 = por %p103, %p104
      %p106 = scmp.ne.s32.totalorder %s94, %s95
      %p107 = scmp.eq.s32.totalorder %s38, 1
      %p108 = por %p106, %p107
      %p110 = scmp.ne.s32.totalorder %s95, %s109
      %p111 = scmp.eq.s32.totalorder %s38, 0
      %p112 = por %p110, %p111
      %s114 = sadd.s32 %s113, 1
      %p117 = scmp.eq.s32.totalorder %s32, 1
      %p118 = scmp.ne.s32.totalorder %s113, %s115
      %p119 = scmp.eq.s32.totalorder %s32, 0
      %p120 = por %p118, %p119
      %p121 = scmp.ne.s32.totalorder %s113, %s115
      %p122 = scmp.eq.s32.totalorder %s37, 1
      %p123 = por %p121, %p122
      %p124 = scmp.ne.s32.totalorder %s115, %s116
      %p125 = scmp.eq.s32.totalorder %s37, 0
      %p126 = por %p124, %p125
      %p127 = scmp.ne.s32.totalorder %s115, %s116
      %p128 = scmp.eq.s32.totalorder %s38, 1
      %p129 = por %p127, %p128
      %p131 = scmp.ne.s32.totalorder %s116, %s130
      %p132 = scmp.eq.s32.totalorder %s38, 0
      %p133 = por %p131, %p132
      %s135 = sadd.s32 %s134, 1
      %p138 = scmp.eq.s32.totalorder %s32, 1
      %p139 = scmp.ne.s32.totalorder %s134, %s136
      %p140 = scmp.eq.s32.totalorder %s32, 0
      %p141 = por %p139, %p140
      %p142 = scmp.ne.s32.totalorder %s134, %s136
      %p143 = scmp.eq.s32.totalorder %s37, 1
      %p144 = por %p142, %p143
      %p145 = scmp.ne.s32.totalorder %s136, %s137
      %p146 = scmp.eq.s32.totalorder %s37, 0
      %p147 = por %p145, %p146
      %p148 = scmp.ne.s32.totalorder %s136, %s137
      %p149 = scmp.eq.s32.totalorder %s38, 1
      %p150 = por %p148, %p149
      %p152 = scmp.ne.s32.totalorder %s137, %s151
      %p153 = scmp.eq.s32.totalorder %s38, 0
      %p154 = por %p152, %p153
      %s156 = sadd.s32 %s155, 1
      %p159 = scmp.eq.s32.totalorder %s32, 1
      %p160 = scmp.ne.s32.totalorder %s155, %s157
      %p161 = scmp.eq.s32.totalorder %s32, 0
      %p162 = por %p160, %p161
      %p163 = scmp.ne.s32.totalorder %s155, %s157
      %p164 = scmp.eq.s32.totalorder %s37, 1
      %p165 = por %p163, %p164
      %p166 = scmp.ne.s32.totalorder %s157, %s158
      %p167 = scmp.eq.s32.totalorder %s37, 0
      %p168 = por %p166, %p167
      %p169 = scmp.ne.s32.totalorder %s157, %s158
      %p170 = scmp.eq.s32.totalorder %s38, 1
      %p171 = por %p169, %p170
      %p173 = scmp.ne.s32.totalorder %s158, %s172
      %p174 = scmp.eq.s32.totalorder %s38, 0
      %p175 = por %p173, %p174
      %s177 = sadd.s32 %s176, 1
      %p180 = scmp.eq.s32.totalorder %s32, 1
      %p181 = scmp.ne.s32.totalorder %s176, %s178
      %p182 = scmp.eq.s32.totalorder %s32, 0
      %p183 = por %p181, %p182
      %p184 = scmp.ne.s32.totalorder %s176, %s178
      %p185 = scmp.eq.s32.totalorder %s37, 1
      %p186 = por %p184, %p185
      %p187 = scmp.ne.s32.totalorder %s178, %s179
      %p188 = scmp.eq.s32.totalorder %s37, 0
      %p189 = por %p187, %p188
      %p190 = scmp.ne.s32.totalorder %s178, %s179
      %p191 = scmp.eq.s32.totalorder %s38, 1
      %p192 = por %p190, %p191
      %p194 = scmp.ne.s32.totalorder %s179, %s193
      %p195 = scmp.eq.s32.totalorder %s38, 0
      %p196 = por %p194, %p195
      %s198 = sadd.s32 %s197, 1
      %p201 = scmp.eq.s32.totalorder %s32, 1
      %p202 = scmp.ne.s32.totalorder %s197, %s199
      %p203 = scmp.eq.s32.totalorder %s32, 0
      %p204 = por %p202, %p203
      %p205 = scmp.ne.s32.totalorder %s197, %s199
      %p206 = scmp.eq.s32.totalorder %s37, 1
      %p207 = por %p205, %p206
      %p208 = scmp.ne.s32.totalorder %s199, %s200
      %p209 = scmp.eq.s32.totalorder %s37, 0
      %p210 = por %p208, %p209
      %p211 = scmp.ne.s32.totalorder %s199, %s200
      %p212 = scmp.eq.s32.totalorder %s38, 1
      %p213 = por %p211, %p212
      %p215 = scmp.ne.s32.totalorder %s200, %s214
      %p216 = scmp.eq.s32.totalorder %s38, 0
      %p217 = por %p215, %p216
      %s219 = sadd.s32 %s218, 1
      %p222 = scmp.eq.s32.totalorder %s32, 1
      %p223 = scmp.ne.s32.totalorder %s218, %s220
      %p224 = scmp.eq.s32.totalorder %s32, 0
      %p225 = por %p223, %p224
      %p226 = scmp.ne.s32.totalorder %s218, %s220
      %p227 = scmp.eq.s32.totalorder %s37, 1
      %p228 = por %p226, %p227
      %p229 = scmp.ne.s32.totalorder %s220, %s221
      %p230 = scmp.eq.s32.totalorder %s37, 0
      %p231 = por %p229, %p230
      %p232 = scmp.ne.s32.totalorder %s220, %s221
      %p233 = scmp.eq.s32.totalorder %s38, 1
      %p234 = por %p232, %p233
      %p236 = scmp.ne.s32.totalorder %s221, %s235
      %p237 = scmp.eq.s32.totalorder %s38, 0
      %p238 = por %p236, %p237
      %s240 = sadd.s32 %s239, 1
      %p243 = scmp.eq.s32.totalorder %s32, 1
      %p244 = scmp.ne.s32.totalorder %s239, %s241
      %p245 = scmp.eq.s32.totalorder %s32, 0
      %p246 = por %p244, %p245
      %p247 = scmp.ne.s32.totalorder %s239, %s241
      %p248 = scmp.eq.s32.totalorder %s37, 1
      %p249 = por %p247, %p248
      %p250 = scmp.ne.s32.totalorder %s241, %s242
      %p251 = scmp.eq.s32.totalorder %s37, 0
      %p252 = por %p250, %p251
      %p253 = scmp.ne.s32.totalorder %s241, %s242
      %p254 = scmp.eq.s32.totalorder %s38, 1
      %p255 = por %p253, %p254
      %p257 = scmp.ne.s32.totalorder %s242, %s256
      %p258 = scmp.eq.s32.totalorder %s38, 0
      %p259 = por %p257, %p258
      %s261 = sadd.s32 %s260, 1
      %p264 = scmp.eq.s32.totalorder %s32, 1
      %p265 = scmp.ne.s32.totalorder %s260, %s262
      %p266 = scmp.eq.s32.totalorder %s32, 0
      %p267 = por %p265, %p266
      %p268 = scmp.ne.s32.totalorder %s260, %s262
      %p269 = scmp.eq.s32.totalorder %s37, 1
      %p270 = por %p268, %p269
      %p271 = scmp.ne.s32.totalorder %s262, %s263
      %p272 = scmp.eq.s32.totalorder %s37, 0
      %p273 = por %p271, %p272
      %p274 = scmp.ne.s32.totalorder %s262, %s263
      %p275 = scmp.eq.s32.totalorder %s38, 1
      %p276 = por %p274, %p275
      %p278 = scmp.ne.s32.totalorder %s263, %s277
      %p279 = scmp.eq.s32.totalorder %s38, 0
      %p280 = por %p278, %p279
      %s282 = sadd.s32 %s281, 1
      %p285 = scmp.eq.s32.totalorder %s32, 1
      %p286 = scmp.ne.s32.totalorder %s281, %s283
      %p287 = scmp.eq.s32.totalorder %s32, 0
      %p288 = por %p286, %p287
      %p289 = scmp.ne.s32.totalorder %s281, %s283
      %p290 = scmp.eq.s32.totalorder %s37, 1
      %p291 = por %p289, %p290
      %p292 = scmp.ne.s32.totalorder %s283, %s284
      %p293 = scmp.eq.s32.totalorder %s37, 0
      %p294 = por %p292, %p293
      %p295 = scmp.ne.s32.totalorder %s283, %s284
      %p296 = scmp.eq.s32.totalorder %s38, 1
      %p297 = por %p295, %p296
      %p299 = scmp.ne.s32.totalorder %s284, %s298
      %p300 = scmp.eq.s32.totalorder %s38, 0
      %p301 = por %p299, %p300
      %s303 = sadd.s32 %s302, 1
      %p306 = scmp.eq.s32.totalorder %s32, 1
      %p307 = scmp.ne.s32.totalorder %s302, %s304
      %p308 = scmp.eq.s32.totalorder %s32, 0
      %p309 = por %p307, %p308
      %p310 = scmp.ne.s32.totalorder %s302, %s304
      %p311 = scmp.eq.s32.totalorder %s37, 1
      %p312 = por %p310, %p311
      %p313 = scmp.ne.s32.totalorder %s304, %s305
      %p314 = scmp.eq.s32.totalorder %s37, 0
      %p315 = por %p313, %p314
      %p316 = scmp.ne.s32.totalorder %s304, %s305
      %p317 = scmp.eq.s32.totalorder %s38, 1
      %p318 = por %p316, %p317
      %p320 = scmp.ne.s32.totalorder %s305, %s319
      %p321 = scmp.eq.s32.totalorder %s38, 0
      %p322 = por %p320, %p321
      %s324 = sadd.s32 %s323, 1
      %p327 = scmp.eq.s32.totalorder %s32, 1
      %p328 = scmp.ne.s32.totalorder %s323, %s325
      %p329 = scmp.eq.s32.totalorder %s32, 0
      %p330 = por %p328, %p329
      %p331 = scmp.ne.s32.totalorder %s323, %s325
      %p332 = scmp.eq.s32.totalorder %s37, 1
      %p333 = por %p331, %p332
      %p334 = scmp.ne.s32.totalorder %s325, %s326
      %p335 = scmp.eq.s32.totalorder %s37, 0
      %p336 = por %p334, %p335
      %p337 = scmp.ne.s32.totalorder %s325, %s326
      %p338 = scmp.eq.s32.totalorder %s38, 1
      %p339 = por %p337, %p338
      %p341 = scmp.ne.s32.totalorder %s326, %s340
      %p342 = scmp.eq.s32.totalorder %s38, 0
      %p343 = por %p341, %p342
      %s345 = sadd.s32 %s344, 1
      %p348 = scmp.eq.s32.totalorder %s32, 1
      %p349 = scmp.ne.s32.totalorder %s344, %s346
      %p350 = scmp.eq.s32.totalorder %s32, 0
      %p351 = por %p349, %p350
      %p352 = scmp.ne.s32.totalorder %s344, %s346
      %p353 = scmp.eq.s32.totalorder %s37, 1
      %p354 = por %p352, %p353
      %p355 = scmp.ne.s32.totalorder %s346, %s347
      %p356 = scmp.eq.s32.totalorder %s37, 0
      %p357 = por %p355, %p356
      %p358 = scmp.ne.s32.totalorder %s346, %s347
      %p359 = scmp.eq.s32.totalorder %s38, 1
      %p360 = por %p358, %p359
      %p362 = scmp.ne.s32.totalorder %s347, %s361
      %p363 = scmp.eq.s32.totalorder %s38, 0
      %p364 = por %p362, %p363
      %s366 = sadd.s32 %s365, 1
      %p369 = scmp.eq.s32.totalorder %s32, 1
      %p370 = scmp.ne.s32.totalorder %s365, %s367
      %p371 = scmp.eq.s32.totalorder %s32, 0
      %p372 = por %p370, %p371
      %p373 = scmp.ne.s32.totalorder %s365, %s367
      %p374 = scmp.eq.s32.totalorder %s37, 1
      %p375 = por %p373, %p374
      %p376 = scmp.ne.s32.totalorder %s367, %s368
      %p377 = scmp.eq.s32.totalorder %s37, 0
      %p378 = por %p376, %p377
      %p379 = scmp.ne.s32.totalorder %s367, %s368
      %p380 = scmp.eq.s32.totalorder %s38, 1
      %p381 = por %p379, %p380
      %p383 = scmp.ne.s32.totalorder %s368, %s382
      %p384 = scmp.eq.s32.totalorder %s38, 0
      %p385 = por %p383, %p384
      %s387 = sadd.s32 %s386, 1
      %p390 = scmp.eq.s32.totalorder %s32, 1
      %p391 = scmp.ne.s32.totalorder %s386, %s388
      %p392 = scmp.eq.s32.totalorder %s32, 0
      %p393 = por %p391, %p392
      %p394 = scmp.ne.s32.totalorder %s386, %s388
      %p395 = scmp.eq.s32.totalorder %s37, 1
      %p396 = por %p394, %p395
      %p397 = scmp.ne.s32.totalorder %s388, %s389
      %p398 = scmp.eq.s32.totalorder %s37, 0
      %p399 = por %p397, %p398
      %p400 = scmp.ne.s32.totalorder %s388, %s389
      %p401 = scmp.eq.s32.totalorder %s38, 1
      %p402 = por %p400, %p401
      %p404 = scmp.ne.s32.totalorder %s389, %s403
      %p405 = scmp.eq.s32.totalorder %s38, 0
      %p406 = por %p404, %p405
      %s407 = ssub.s32 %s32, %s39
      %p408 = scmp.eq.s32.totalorder %s407, 0
      %s410 = sadd.s32 %s409, 1
      %s411 = scalar_select %p408, %s409, %s410
      %p414 = pneg %p408
      %p415 = scmp.eq.s32.totalorder %s32, 1
      %p416 = por %p414, %p415
      %p417 = scmp.ne.s32.totalorder %s409, %s412
      %p418 = scmp.eq.s32.totalorder %s32, 0
      %p419 = por %p417, %p418
      %p420 = scmp.ne.s32.totalorder %s409, %s412
      %p421 = scmp.eq.s32.totalorder %s37, 1
      %p422 = por %p420, %p421
      %p423 = scmp.ne.s32.totalorder %s412, %s413
      %p424 = scmp.eq.s32.totalorder %s37, 0
      %p425 = por %p423, %p424
      %p426 = scmp.ne.s32.totalorder %s412, %s413
      %p427 = scmp.eq.s32.totalorder %s38, 1
      %p428 = por %p426, %p427
      %p430 = scmp.ne.s32.totalorder %s413, %s429
      %p431 = scmp.eq.s32.totalorder %s38, 0
      %p432 = por %p430, %p431
      %p433 = scmp.le.s32.totalorder 1, %s32
      %p434 = scmp.lt.s32.totalorder %s32, 3
      %p435 = pnand %p433, %p434
      %p436 = pneg %p435
      // Predicated region
      $region9: #{fwd.1} parent=5 // pred_check
        _
      $region10: #{fwd.1} parent=5 // pred_check_branch
        %438 = sbr.rel (%p435) target = $region12
      $region11: #{fwd.1} parent=5 // pred_region
        %s439 = ssub.s32 %s32, 1
        // Predicated region
        $region13: #{fwd.1} parent=11 // pred_check
          %p440 = pneg %p105
        $region14: #{fwd.1} parent=11 // pred_check_branch
          %442 = sbr.rel (%p440) target = $region16
        $region15: #{fwd.1} parent=11 // pred_region
          %444 = vsyncadd [#allocation4], 0
          %s445 = sshll.u32 %s2, 4
          %s446 = int_to_ptr.hbm [resolvable:$true] %s445
          %s447 = sshll.u32 [#allocation3], 4
          %s448 = int_to_ptr.vmem [resolvable:$true] %s447
          %453 = dma.hbm_to_vmem [thread:$0]  %s446, 5120, %s448, [#allocation4], 640, 640, 40
        $region16: #{fwd.1} parent=11 // pred_fallthru
          _
        // Predicated region
        $region17: #{fwd.1} parent=11 // pred_check
          %p454 = pneg %p126
        $region18: #{fwd.1} parent=11 // pred_check_branch
          %456 = sbr.rel (%p454) target = $region20
        $region19: #{fwd.1} parent=11 // pred_region
          _
        $region20: #{fwd.1} parent=11 // pred_fallthru
          _
        // Predicated region
        $region21: #{fwd.1} parent=11 // pred_check
          %p457 = pneg %p147
        $region22: #{fwd.1} parent=11 // pred_check_branch
          %459 = sbr.rel (%p457) target = $region24
        $region23: #{fwd.1} parent=11 // pred_region
          %461 = vsyncadd [#allocation6], 0
          %s462 = sshll.u32 %s4, 4
          %s463 = int_to_ptr.hbm [resolvable:$true] %s462
          %s464 = sshll.u32 [#allocation5], 4
          %s465 = int_to_ptr.vmem [resolvable:$true] %s464
          %470 = dma.hbm_to_vmem [thread:$0]  %s463, 1024, %s465, [#allocation6], 128, 128, 8
        $region24: #{fwd.1} parent=11 // pred_fallthru
          _
        // Predicated region
        $region25: #{fwd.1} parent=11 // pred_check
          %p471 = pneg %p168
        $region26: #{fwd.1} parent=11 // pred_check_branch
          %473 = sbr.rel (%p471) target = $region28
        $region27: #{fwd.1} parent=11 // pred_region
          %475 = vsyncadd [#allocation6], 0
          %s476 = sshll.u32 %s5, 4
          %s477 = int_to_ptr.hbm [resolvable:$true] %s476
          %s478 = sshll.u32 [#allocation7], 4
          %s479 = int_to_ptr.vmem [resolvable:$true] %s478
          %484 = dma.hbm_to_vmem [thread:$0]  %s477, 1024, %s479, [#allocation6], 128, 128, 8
        $region28: #{fwd.1} parent=11 // pred_fallthru
          _
        // Predicated region
        $region29: #{fwd.1} parent=11 // pred_check
          %p485 = pneg %p189
        $region30: #{fwd.1} parent=11 // pred_check_branch
          %487 = sbr.rel (%p485) target = $region32
        $region31: #{fwd.1} parent=11 // pred_region
          %489 = vsyncadd [#allocation9], 0
          %s490 = sshll.u32 %s6, 4
          %s491 = int_to_ptr.hbm [resolvable:$true] %s490
          %s492 = sshll.u32 [#allocation8], 4
          %s493 = int_to_ptr.vmem [resolvable:$true] %s492
          %498 = dma.hbm_to_vmem [thread:$0]  %s491, 2048, %s493, [#allocation9], 256, 256, 16
        $region32: #{fwd.1} parent=11 // pred_fallthru
          _
        // Predicated region
        $region33: #{fwd.1} parent=11 // pred_check
          %p499 = pneg %p210
        $region34: #{fwd.1} parent=11 // pred_check_branch
          %501 = sbr.rel (%p499) target = $region36
        $region35: #{fwd.1} parent=11 // pred_region
          %503 = vsyncadd [#allocation9], 0
          %s504 = sshll.u32 %s7, 4
          %s505 = int_to_ptr.hbm [resolvable:$true] %s504
          %s506 = sshll.u32 [#allocation10], 4
          %s507 = int_to_ptr.vmem [resolvable:$true] %s506
          %512 = dma.hbm_to_vmem [thread:$0]  %s505, 1024, %s507, [#allocation9], 128, 128, 8
        $region36: #{fwd.1} parent=11 // pred_fallthru
          _
        // Predicated region
        $region37: #{fwd.1} parent=11 // pred_check
          %p513 = pneg %p231
        $region38: #{fwd.1} parent=11 // pred_check_branch
          %515 = sbr.rel (%p513) target = $region40
        $region39: #{fwd.1} parent=11 // pred_region
          %517 = vsyncadd [#allocation12], 0
          %s518 = sshll.u32 %s8, 4
          %s519 = int_to_ptr.hbm [resolvable:$true] %s518
          %s520 = sshll.u32 [#allocation11], 4
          %s521 = int_to_ptr.vmem [resolvable:$true] %s520
          %526 = dma.hbm_to_vmem [thread:$0]  %s519, 256, %s521, [#allocation12], 128, 128, 8
        $region40: #{fwd.1} parent=11 // pred_fallthru
          _
        // Predicated region
        $region41: #{fwd.1} parent=11 // pred_check
          %p527 = pneg %p252
        $region42: #{fwd.1} parent=11 // pred_check_branch
          %529 = sbr.rel (%p527) target = $region44
        $region43: #{fwd.1} parent=11 // pred_region
          %531 = vsyncadd [#allocation12], 0
          %s532 = sshll.u32 %s9, 4
          %s533 = int_to_ptr.hbm [resolvable:$true] %s532
          %s534 = sshll.u32 [#allocation13], 4
          %s535 = int_to_ptr.vmem [resolvable:$true] %s534
          %540 = dma.hbm_to_vmem [thread:$0]  %s533, 2048, %s535, [#allocation12], 256, 256, 16
        $region44: #{fwd.1} parent=11 // pred_fallthru
          _
        // Predicated region
        $region45: #{fwd.1} parent=11 // pred_check
          %p541 = pneg %p273
        $region46: #{fwd.1} parent=11 // pred_check_branch
          %543 = sbr.rel (%p541) target = $region48
        $region47: #{fwd.1} parent=11 // pred_region
          %545 = vsyncadd [#allocation15], 0
          %s546 = sshll.u32 %s10, 4
          %s547 = int_to_ptr.hbm [resolvable:$true] %s546
          %s548 = sshll.u32 [#allocation14], 4
          %s549 = int_to_ptr.vmem [resolvable:$true] %s548
          %554 = dma.hbm_to_vmem [thread:$0]  %s547, 1024, %s549, [#allocation15], 128, 128, 8
        $region48: #{fwd.1} parent=11 // pred_fallthru
          _
        // Predicated region
        $region49: #{fwd.1} parent=11 // pred_check
          %p555 = pneg %p294
        $region50: #{fwd.1} parent=11 // pred_check_branch
          %557 = sbr.rel (%p555) target = $region52
        $region51: #{fwd.1} parent=11 // pred_region
          %559 = vsyncadd [#allocation15], 0
          %s560 = sshll.u32 %s11, 4
          %s561 = int_to_ptr.hbm [resolvable:$true] %s560
          %s562 = sshll.u32 [#allocation16], 4
          %s563 = int_to_ptr.vmem [resolvable:$true] %s562
          %568 = dma.hbm_to_vmem [thread:$0]  %s561, 256, %s563, [#allocation15], 128, 128, 8
        $region52: #{fwd.1} parent=11 // pred_fallthru
          _
        // Predicated region
        $region53: #{fwd.1} parent=11 // pred_check
          %p569 = pneg %p315
        $region54: #{fwd.1} parent=11 // pred_check_branch
          %571 = sbr.rel (%p569) target = $region56
        $region55: #{fwd.1} parent=11 // pred_region
          %573 = vsyncadd [#allocation18], 0
          %s574 = sshll.u32 %s12, 4
          %s575 = int_to_ptr.hbm [resolvable:$true] %s574
          %s576 = sshll.u32 [#allocation17], 4
          %s577 = int_to_ptr.vmem [resolvable:$true] %s576
          %582 = dma.hbm_to_vmem [thread:$0]  %s575, 2048, %s577, [#allocation18], 256, 256, 16
        $region56: #{fwd.1} parent=11 // pred_fallthru
          _
        // Predicated region
        $region57: #{fwd.1} parent=11 // pred_check
          %p583 = pneg %p336
        $region58: #{fwd.1} parent=11 // pred_check_branch
          %585 = sbr.rel (%p583) target = $region60
        $region59: #{fwd.1} parent=11 // pred_region
          %587 = vsyncadd [#allocation18], 0
          %s588 = sshll.u32 %s13, 4
          %s589 = int_to_ptr.hbm [resolvable:$true] %s588
          %s590 = sshll.u32 [#allocation19], 4
          %s591 = int_to_ptr.vmem [resolvable:$true] %s590
          %596 = dma.hbm_to_vmem [thread:$0]  %s589, 1024, %s591, [#allocation18], 128, 128, 8
        $region60: #{fwd.1} parent=11 // pred_fallthru
          _
        // Predicated region
        $region61: #{fwd.1} parent=11 // pred_check
          %p597 = pneg %p357
        $region62: #{fwd.1} parent=11 // pred_check_branch
          %599 = sbr.rel (%p597) target = $region64
        $region63: #{fwd.1} parent=11 // pred_region
          %601 = vsyncadd [#allocation21], 0
          %s602 = sshll.u32 %s14, 4
          %s603 = int_to_ptr.hbm [resolvable:$true] %s602
          %s604 = sshll.u32 [#allocation20], 4
          %s605 = int_to_ptr.vmem [resolvable:$true] %s604
          %610 = dma.hbm_to_vmem [thread:$0]  %s603, 256, %s605, [#allocation21], 128, 128, 8
        $region64: #{fwd.1} parent=11 // pred_fallthru
          _
        // Predicated region
        $region65: #{fwd.1} parent=11 // pred_check
          %p611 = pneg %p378
        $region66: #{fwd.1} parent=11 // pred_check_branch
          %613 = sbr.rel (%p611) target = $region68
        $region67: #{fwd.1} parent=11 // pred_region
          %615 = vsyncadd [#allocation21], 0
          %s616 = sshll.u32 %s15, 4
          %s617 = int_to_ptr.hbm [resolvable:$true] %s616
          %s618 = sshll.u32 [#allocation22], 4
          %s619 = int_to_ptr.vmem [resolvable:$true] %s618
          %624 = dma.hbm_to_vmem [thread:$0]  %s617, 4096, %s619, [#allocation21], 128, 128, 8
        $region68: #{fwd.1} parent=11 // pred_fallthru
          _
        // Predicated region
        $region69: #{fwd.1} parent=11 // pred_check
          %p625 = pneg %p399
        $region70: #{fwd.1} parent=11 // pred_check_branch
          %627 = sbr.rel (%p625) target = $region72
        $region71: #{fwd.1} parent=11 // pred_region
          _
        $region72: #{fwd.1} parent=11 // pred_fallthru
          _
      $region12: #{fwd.1} parent=5 // pred_fallthru
        _
      %p628 = scmp.lt.s32.totalorder %s32, 2
      // Predicated region
      $region73: #{fwd.1} parent=5 // pred_check
        %p629 = pneg %p628
      $region74: #{fwd.1} parent=5 // pred_check_branch
        %631 = sbr.rel (%p629) target = $region76
      $region75: #{fwd.1} parent=5 // pred_region
        // Predicated region
        $region77: #{fwd.1} parent=75 // pred_check
          %p632 = pneg %p52
        $region78: #{fwd.1} parent=75 // pred_check_branch
          %634 = sbr.rel (%p632) target = $region80
        $region79: #{fwd.1} parent=75 // pred_region
          %p635 = scmp.lt.s32.totalorder %s32, 1
          %s636 = scalar_select %p635, %s32, 1
          %s637 = smul.addr %s636, 2
          %s638 = smul.addr %s637, 8
          %s639 = scalar_lea.vmem %s0, %s638
        $region80: #{fwd.1} parent=75 // pred_fallthru
          _
        // Predicated region
        $region81: #{fwd.1} parent=75 // pred_check
          %p640 = pneg %p78
        $region82: #{fwd.1} parent=75 // pred_check_branch
          %642 = sbr.rel (%p640) target = $region84
        $region83: #{fwd.1} parent=75 // pred_region
          %p643 = scmp.lt.s32.totalorder %s32, 1
          %s644 = scalar_select %p643, %s32, 1
          %s645 = smul.addr %s644, 2
          %s646 = smul.addr %s645, 8
          %s647 = scalar_lea.vmem %s1, %s646
        $region84: #{fwd.1} parent=75 // pred_fallthru
          _
      $region76: #{fwd.1} parent=5 // pred_fallthru
        _
      %p648 = scmp.le.s32.totalorder 1, %s32
      %p649 = scmp.lt.s32.totalorder %s32, 3
      %p650 = pnand %p648, %p649
      %p651 = pneg %p650
      // Predicated region
      $region85: #{fwd.1} parent=5 // pred_check
        _
      $region86: #{fwd.1} parent=5 // pred_check_branch
        %653 = sbr.rel (%p650) target = $region88
      $region87: #{fwd.1} parent=5 // pred_region
        %s654 = ssub.s32 %s32, 1
        // Predicated region
        $region89: #{fwd.1} parent=87 // pred_check
          %p655 = pneg %p105
        $region90: #{fwd.1} parent=87 // pred_check_branch
          %657 = sbr.rel (%p655) target = $region92
        $region91: #{fwd.1} parent=87 // pred_region
          %659 = dma.done [#allocation4], 5120
        $region92: #{fwd.1} parent=87 // pred_fallthru
          _
        // Predicated region
        $region93: #{fwd.1} parent=87 // pred_check
          %p660 = pneg %p147
        $region94: #{fwd.1} parent=87 // pred_check_branch
          %662 = sbr.rel (%p660) target = $region96
        $region95: #{fwd.1} parent=87 // pred_region
          %664 = dma.done [#allocation6], 1024
        $region96: #{fwd.1} parent=87 // pred_fallthru
          _
        // Predicated region
        $region97: #{fwd.1} parent=87 // pred_check
          %p665 = pneg %p168
        $region98: #{fwd.1} parent=87 // pred_check_branch
          %667 = sbr.rel (%p665) target = $region100
        $region99: #{fwd.1} parent=87 // pred_region
          %669 = dma.done [#allocation6], 1024
        $region100: #{fwd.1} parent=87 // pred_fallthru
          _
        // Predicated region
        $region101: #{fwd.1} parent=87 // pred_check
          %p670 = pneg %p189
        $region102: #{fwd.1} parent=87 // pred_check_branch
          %672 = sbr.rel (%p670) target = $region104
        $region103: #{fwd.1} parent=87 // pred_region
          %674 = dma.done [#allocation9], 2048
        $region104: #{fwd.1} parent=87 // pred_fallthru
          _
        // Predicated region
        $region105: #{fwd.1} parent=87 // pred_check
          %p675 = pneg %p210
        $region106: #{fwd.1} parent=87 // pred_check_branch
          %677 = sbr.rel (%p675) target = $region108
        $region107: #{fwd.1} parent=87 // pred_region
          %679 = dma.done [#allocation9], 1024
        $region108: #{fwd.1} parent=87 // pred_fallthru
          _
        // Predicated region
        $region109: #{fwd.1} parent=87 // pred_check
          %p680 = pneg %p231
        $region110: #{fwd.1} parent=87 // pred_check_branch
          %682 = sbr.rel (%p680) target = $region112
        $region111: #{fwd.1} parent=87 // pred_region
          %684 = dma.done [#allocation12], 256
        $region112: #{fwd.1} parent=87 // pred_fallthru
          _
        // Predicated region
        $region113: #{fwd.1} parent=87 // pred_check
          %p685 = pneg %p252
        $region114: #{fwd.1} parent=87 // pred_check_branch
          %687 = sbr.rel (%p685) target = $region116
        $region115: #{fwd.1} parent=87 // pred_region
          %689 = dma.done [#allocation12], 2048
        $region116: #{fwd.1} parent=87 // pred_fallthru
          _
        // Predicated region
        $region117: #{fwd.1} parent=87 // pred_check
          %p690 = pneg %p273
        $region118: #{fwd.1} parent=87 // pred_check_branch
          %692 = sbr.rel (%p690) target = $region120
        $region119: #{fwd.1} parent=87 // pred_region
          %694 = dma.done [#allocation15], 1024
        $region120: #{fwd.1} parent=87 // pred_fallthru
          _
        // Predicated region
        $region121: #{fwd.1} parent=87 // pred_check
          %p695 = pneg %p294
        $region122: #{fwd.1} parent=87 // pred_check_branch
          %697 = sbr.rel (%p695) target = $region124
        $region123: #{fwd.1} parent=87 // pred_region
          %699 = dma.done [#allocation15], 256
        $region124: #{fwd.1} parent=87 // pred_fallthru
          _
        // Predicated region
        $region125: #{fwd.1} parent=87 // pred_check
          %p700 = pneg %p315
        $region126: #{fwd.1} parent=87 // pred_check_branch
          %702 = sbr.rel (%p700) target = $region128
        $region127: #{fwd.1} parent=87 // pred_region
          %704 = dma.done [#allocation18], 2048
        $region128: #{fwd.1} parent=87 // pred_fallthru
          _
        // Predicated region
        $region129: #{fwd.1} parent=87 // pred_check
          %p705 = pneg %p336
        $region130: #{fwd.1} parent=87 // pred_check_branch
          %707 = sbr.rel (%p705) target = $region132
        $region131: #{fwd.1} parent=87 // pred_region
          %709 = dma.done [#allocation18], 1024
        $region132: #{fwd.1} parent=87 // pred_fallthru
          _
        // Predicated region
        $region133: #{fwd.1} parent=87 // pred_check
          %p710 = pneg %p357
        $region134: #{fwd.1} parent=87 // pred_check_branch
          %712 = sbr.rel (%p710) target = $region136
        $region135: #{fwd.1} parent=87 // pred_region
          %714 = dma.done [#allocation21], 256
        $region136: #{fwd.1} parent=87 // pred_fallthru
          _
        // Predicated region
        $region137: #{fwd.1} parent=87 // pred_check
          %p715 = pneg %p378
        $region138: #{fwd.1} parent=87 // pred_check_branch
          %717 = sbr.rel (%p715) target = $region140
        $region139: #{fwd.1} parent=87 // pred_region
          %719 = dma.done [#allocation21], 4096
        $region140: #{fwd.1} parent=87 // pred_fallthru
          _
        %p720 = scmp.lt.s32.totalorder %s37, 1
        %s721 = scalar_select %p720, %s37, 1
        %s722 = smul.addr %s721, 2
        %s723 = smul.addr %s722, 8
        %s724 = scalar_lea.vmem %s0, %s723
        %p725 = pneg %p58
        %p726 = pneg %p55
        %p727 = scmp.lt.s32.totalorder %s37, 1
        %s728 = scalar_select %p727, %s37, 1
        %s729 = smul.addr %s728, 2
        %s730 = smul.addr %s729, 8
        %s731 = scalar_lea.vmem %s1, %s730
        %p732 = pneg %p84
        %p733 = pneg %p81
        %p734 = pneg %p105
        %p735 = pneg %p102
        %p736 = pneg %p126
        %p737 = pneg %p123
        %p738 = pneg %p147
        %p739 = pneg %p144
        %p740 = pneg %p168
        %p741 = pneg %p165
        %p742 = pneg %p189
        %p743 = pneg %p186
        %p744 = pneg %p210
        %p745 = pneg %p207
        %p746 = pneg %p231
        %p747 = pneg %p228
        %p748 = pneg %p252
        %p749 = pneg %p249
        %p750 = pneg %p273
        %p751 = pneg %p270
        %p752 = pneg %p294
        %p753 = pneg %p291
        %p754 = pneg %p315
        %p755 = pneg %p312
        %p756 = pneg %p336
        %p757 = pneg %p333
        %p758 = pneg %p357
        %p759 = pneg %p354
        %p760 = pneg %p378
        %p761 = pneg %p375
        %p762 = pneg %p399
        %p763 = pneg %p396
        %p764 = pneg %p425
        %p765 = pneg %p422
        %p766 = scmp.lt.s32.totalorder %s37, 1
        %s767 = scalar_select %p766, %s37, 1
        %s768 = scalar_lea.vmem %s17, %s767
        %p769 = scmp.lt.s32.totalorder %s37, 1
        %s770 = scalar_select %p769, %s37, 1
        %s771 = smul.addr %s770, 2
        %s772 = smul.addr %s771, 8
        %s773 = scalar_lea.vmem %s0, %s772
        %p774 = scmp.lt.s32.totalorder %s37, 1
        %s775 = scalar_select %p774, %s37, 1
        %s776 = smul.addr %s775, 2
        %s777 = smul.addr %s776, 8
        %s778 = scalar_lea.vmem %s1, %s777
        %p779 = scmp.lt.s32.totalorder %s37, 1
        %s780 = scalar_select %p779, %s37, 1
        %s781 = scalar_lea.vmem %s17, %s780
        %v782 = vld [vmem:[%s773] sm:$0xff]
        %v783 = vld [vmem:[%s773 + $0x8] sm:$0xff]
        %v784 = vld [vmem:[%s778] sm:$0xff]
        %v785 = vld [vmem:[%s778 + $0x8] sm:$0xff]
        %v786 = vld [vmem:[#allocation3] sm:$0xff]
        %v787 = vld [vmem:[#allocation3 + $0x8] sm:$0xff]
        %v788 = vld [vmem:[#allocation3 + $0x10] sm:$0xff]
        %v789 = vld [vmem:[#allocation3 + $0x18] sm:$0xff]
        %v790 = vld [vmem:[#allocation3 + $0x20] sm:$0xff]
        %v791 = vld [vmem:[#allocation3 + $0x28] sm:$0xff]
        %v792 = vld [vmem:[#allocation3 + $0x30] sm:$0xff]
        %v793 = vld [vmem:[#allocation3 + $0x38] sm:$0xff]
        %v794 = vld [vmem:[#allocation3 + $0x40] sm:$0xff]
        %v795 = vld [vmem:[#allocation3 + $0x48] sm:$0xff]
        %v796 = vld [vmem:[#allocation3 + $0x50] sm:$0xff]
        %v797 = vld [vmem:[#allocation3 + $0x58] sm:$0xff]
        %v798 = vld [vmem:[#allocation3 + $0x60] sm:$0xff]
        %v799 = vld [vmem:[#allocation3 + $0x68] sm:$0xff]
        %v800 = vld [vmem:[#allocation3 + $0x70] sm:$0xff]
        %v801 = vld [vmem:[#allocation3 + $0x78] sm:$0xff]
        %v802 = vld [vmem:[#allocation3 + $0x80] sm:$0xff]
        %v803 = vld [vmem:[#allocation3 + $0x88] sm:$0xff]
        %v804 = vld [vmem:[#allocation3 + $0x90] sm:$0xff]
        %v805 = vld [vmem:[#allocation3 + $0x98] sm:$0xff]
        %v806 = vld [vmem:[#allocation3 + $0xa0] sm:$0xff]
        %v807 = vld [vmem:[#allocation3 + $0xa8] sm:$0xff]
        %v808 = vld [vmem:[#allocation3 + $0xb0] sm:$0xff]
        %v809 = vld [vmem:[#allocation3 + $0xb8] sm:$0xff]
        %v810 = vld [vmem:[#allocation3 + $0xc0] sm:$0xff]
        %v811 = vld [vmem:[#allocation3 + $0xc8] sm:$0xff]
        %v812 = vld [vmem:[#allocation3 + $0xd0] sm:$0xff]
        %v813 = vld [vmem:[#allocation3 + $0xd8] sm:$0xff]
        %v814 = vld [vmem:[#allocation3 + $0xe0] sm:$0xff]
        %v815 = vld [vmem:[#allocation3 + $0xe8] sm:$0xff]
        %v816 = vld [vmem:[#allocation3 + $0xf0] sm:$0xff]
        %v817 = vld [vmem:[#allocation3 + $0xf8] sm:$0xff]
        %v818 = vld [vmem:[#allocation3 + $0x100] sm:$0xff]
        %v819 = vld [vmem:[#allocation3 + $0x108] sm:$0xff]
        %v820 = vld [vmem:[#allocation3 + $0x110] sm:$0xff]
        %v821 = vld [vmem:[#allocation3 + $0x118] sm:$0xff]
        %v822 = vld [vmem:[#allocation3 + $0x120] sm:$0xff]
        %v823 = vld [vmem:[#allocation3 + $0x128] sm:$0xff]
        %v824 = vld [vmem:[#allocation3 + $0x130] sm:$0xff]
        %v825 = vld [vmem:[#allocation3 + $0x138] sm:$0xff]
        %vm826 = vcmask 523264
        %v828 = vsel %vm826, %v782, 0
        %v831 = vsel %vm826, %v783, 0
        %v834 = vsel %vm826, %v784, 0
        %v837 = vsel %vm826, %v785, 0
        %839 = vmatpush.msra.mxu0 0.0
        %840 = vmatpush.msra.mxu0 0.0
        %841 = vmatpush.msra.mxu0 0.0
        %842 = vmatpush.msra.mxu0 0.0
        %843 = vmatpush.msra.mxu0 0.0
        %844 = vmatpush.msra.mxu0 0.0
        %845 = vmatpush.msra.mxu0 0.0
        %846 = vmatpush.msra.mxu0 0.0
        %847 = vmatpush.msra.mxu0 %v821
        %848 = vmatpush.msra.mxu0 %v816
        %849 = vmatpush.msra.mxu0 %v811
        %850 = vmatpush.msra.mxu0 %v806
        %851 = vmatpush.msra.mxu0 %v801
        %852 = vmatpush.msra.mxu0 %v796
        %853 = vmatpush.msra.mxu0 %v791
        %854 = vmatpush.msra.mxu0 %v786
        %855 = vmatmul.f32.gmra.mxu0 %v828
        %v856 = vpop.f32.mrf.mxu0
        %v857 = vadd.f32 0.0, %v856
        %858 = vmatmul.f32.gmra.mxu0 %v831
        %v859 = vpop.f32.mrf.mxu0
        %v860 = vadd.f32 0.0, %v859
        %861 = vmatmul.f32.gmra.mxu0 %v834
        %v862 = vpop.f32.mrf.mxu0
        %v863 = vadd.f32 0.0, %v862
        %864 = vmatmul.f32.gmra.mxu0 %v837
        %v865 = vpop.f32.mrf.mxu0
        %v866 = vadd.f32 0.0, %v865
        %867 = vdwg.mxu0
        %868 = vmatpush.msra.mxu0 0.0
        %869 = vmatpush.msra.mxu0 0.0
        %870 = vmatpush.msra.mxu0 0.0
        %871 = vmatpush.msra.mxu0 0.0
        %872 = vmatpush.msra.mxu0 0.0
        %873 = vmatpush.msra.mxu0 0.0
        %874 = vmatpush.msra.mxu0 0.0
        %875 = vmatpush.msra.mxu0 0.0
        %876 = vmatpush.msra.mxu0 %v822
        %877 = vmatpush.msra.mxu0 %v817
        %878 = vmatpush.msra.mxu0 %v812
        %879 = vmatpush.msra.mxu0 %v807
        %880 = vmatpush.msra.mxu0 %v802
        %881 = vmatpush.msra.mxu0 %v797
        %882 = vmatpush.msra.mxu0 %v792
        %883 = vmatpush.msra.mxu0 %v787
        %884 = vmatmul.f32.gmra.mxu0 %v828
        %v885 = vpop.f32.mrf.mxu0
        %v886 = vadd.f32 0.0, %v885
        %887 = vmatmul.f32.gmra.mxu0 %v831
        %v888 = vpop.f32.mrf.mxu0
        %v889 = vadd.f32 0.0, %v888
        %890 = vmatmul.f32.gmra.mxu0 %v834
        %v891 = vpop.f32.mrf.mxu0
        %v892 = vadd.f32 0.0, %v891
        %893 = vmatmul.f32.gmra.mxu0 %v837
        %v894 = vpop.f32.mrf.mxu0
        %v895 = vadd.f32 0.0, %v894
        %896 = vdwg.mxu0
        %897 = vmatpush.msra.mxu0 0.0
        %898 = vmatpush.msra.mxu0 0.0
        %899 = vmatpush.msra.mxu0 0.0
        %900 = vmatpush.msra.mxu0 0.0
        %901 = vmatpush.msra.mxu0 0.0
        %902 = vmatpush.msra.mxu0 0.0
        %903 = vmatpush.msra.mxu0 0.0
        %904 = vmatpush.msra.mxu0 0.0
        %905 = vmatpush.msra.mxu0 %v823
        %906 = vmatpush.msra.mxu0 %v818
        %907 = vmatpush.msra.mxu0 %v813
        %908 = vmatpush.msra.mxu0 %v808
        %909 = vmatpush.msra.mxu0 %v803
        %910 = vmatpush.msra.mxu0 %v798
        %911 = vmatpush.msra.mxu0 %v793
        %912 = vmatpush.msra.mxu0 %v788
        %913 = vmatmul.f32.gmra.mxu0 %v828
        %v914 = vpop.f32.mrf.mxu0
        %v915 = vadd.f32 0.0, %v914
        %916 = vmatmul.f32.gmra.mxu0 %v831
        %v917 = vpop.f32.mrf.mxu0
        %v918 = vadd.f32 0.0, %v917
        %919 = vmatmul.f32.gmra.mxu0 %v834
        %v920 = vpop.f32.mrf.mxu0
        %v921 = vadd.f32 0.0, %v920
        %922 = vmatmul.f32.gmra.mxu0 %v837
        %v923 = vpop.f32.mrf.mxu0
        %v924 = vadd.f32 0.0, %v923
        %925 = vdwg.mxu0
        %926 = vmatpush.msra.mxu0 0.0
        %927 = vmatpush.msra.mxu0 0.0
        %928 = vmatpush.msra.mxu0 0.0
        %929 = vmatpush.msra.mxu0 0.0
        %930 = vmatpush.msra.mxu0 0.0
        %931 = vmatpush.msra.mxu0 0.0
        %932 = vmatpush.msra.mxu0 0.0
        %933 = vmatpush.msra.mxu0 0.0
        %934 = vmatpush.msra.mxu0 %v824
        %935 = vmatpush.msra.mxu0 %v819
        %936 = vmatpush.msra.mxu0 %v814
        %937 = vmatpush.msra.mxu0 %v809
        %938 = vmatpush.msra.mxu0 %v804
        %939 = vmatpush.msra.mxu0 %v799
        %940 = vmatpush.msra.mxu0 %v794
        %941 = vmatpush.msra.mxu0 %v789
        %942 = vmatmul.f32.gmra.mxu0 %v828
        %v943 = vpop.f32.mrf.mxu0
        %v944 = vadd.f32 0.0, %v943
        %945 = vmatmul.f32.gmra.mxu0 %v831
        %v946 = vpop.f32.mrf.mxu0
        %v947 = vadd.f32 0.0, %v946
        %948 = vmatmul.f32.gmra.mxu0 %v834
        %v949 = vpop.f32.mrf.mxu0
        %v950 = vadd.f32 0.0, %v949
        %951 = vmatmul.f32.gmra.mxu0 %v837
        %v952 = vpop.f32.mrf.mxu0
        %v953 = vadd.f32 0.0, %v952
        %954 = vdwg.mxu0
        %955 = vmatpush.msra.mxu0 0.0
        %956 = vmatpush.msra.mxu0 0.0
        %957 = vmatpush.msra.mxu0 0.0
        %958 = vmatpush.msra.mxu0 0.0
        %959 = vmatpush.msra.mxu0 0.0
        %960 = vmatpush.msra.mxu0 0.0
        %961 = vmatpush.msra.mxu0 0.0
        %962 = vmatpush.msra.mxu0 0.0
        %963 = vmatpush.msra.mxu0 %v825
        %964 = vmatpush.msra.mxu0 %v820
        %965 = vmatpush.msra.mxu0 %v815
        %966 = vmatpush.msra.mxu0 %v810
        %967 = vmatpush.msra.mxu0 %v805
        %968 = vmatpush.msra.mxu0 %v800
        %969 = vmatpush.msra.mxu0 %v795
        %970 = vmatpush.msra.mxu0 %v790
        %971 = vmatmul.f32.gmra.mxu0 %v828
        %v972 = vpop.f32.mrf.mxu0
        %v973 = vadd.f32 0.0, %v972
        %974 = vmatmul.f32.gmra.mxu0 %v831
        %v975 = vpop.f32.mrf.mxu0
        %v976 = vadd.f32 0.0, %v975
        %977 = vmatmul.f32.gmra.mxu0 %v834
        %v978 = vpop.f32.mrf.mxu0
        %v979 = vadd.f32 0.0, %v978
        %980 = vmatmul.f32.gmra.mxu0 %v837
        %v981 = vpop.f32.mrf.mxu0
        %v982 = vadd.f32 0.0, %v981
        %983 = vdwg.mxu0
        %988 = vrot.lane.b32.xlu0 %v857, 64
        %v989 = vpop.permute.xlu0 %988
        %990 = vrot.lane.b32.xlu0 %v860, 64
        %v991 = vpop.permute.xlu0 %990
        %992 = vrot.lane.b32.xlu0 %v863, 64
        %v993 = vpop.permute.xlu0 %992
        %994 = vrot.lane.b32.xlu0 %v866, 64
        %v995 = vpop.permute.xlu0 %994
        %1004 = vrot.lane.b32.xlu0 %v886, 64
        %v1005 = vpop.permute.xlu0 %1004
        %1006 = vrot.lane.b32.xlu0 %v889, 64
        %v1007 = vpop.permute.xlu0 %1006
        %1008 = vrot.lane.b32.xlu0 %v892, 64
        %v1009 = vpop.permute.xlu0 %1008
        %1010 = vrot.lane.b32.xlu0 %v895, 64
        %v1011 = vpop.permute.xlu0 %1010
        %1020 = vrot.lane.b32.xlu0 %v915, 64
        %v1021 = vpop.permute.xlu0 %1020
        %1022 = vrot.lane.b32.xlu0 %v918, 64
        %v1023 = vpop.permute.xlu0 %1022
        %1024 = vrot.lane.b32.xlu0 %v921, 64
        %v1025 = vpop.permute.xlu0 %1024
        %1026 = vrot.lane.b32.xlu0 %v924, 64
        %v1027 = vpop.permute.xlu0 %1026
        %1036 = vrot.lane.b32.xlu0 %v944, 64
        %v1037 = vpop.permute.xlu0 %1036
        %1038 = vrot.lane.b32.xlu0 %v947, 64
        %v1039 = vpop.permute.xlu0 %1038
        %1040 = vrot.lane.b32.xlu0 %v950, 64
        %v1041 = vpop.permute.xlu0 %1040
        %1042 = vrot.lane.b32.xlu0 %v953, 64
        %v1043 = vpop.permute.xlu0 %1042
        %v1048 = vld [vmem:[%s3] sm:$0xff]
        %v1049 = vld [vmem:[%s3 + $0x8] sm:$0xff]
        %v1050 = vld [vmem:[%s3 + $0x10] sm:$0xff]
        %v1051 = vld [vmem:[%s3 + $0x18] sm:$0xff]
        %v1052 = vld [vmem:[%s3 + $0x20] sm:$0xff]
        %v1053 = vld [vmem:[%s3 + $0x28] sm:$0xff]
        %v1054 = vld [vmem:[%s3 + $0x30] sm:$0xff]
        %v1055 = vld [vmem:[%s3 + $0x38] sm:$0xff]
        %v1056 = vld [vmem:[%s3 + $0x40] sm:$0xff]
        %v1057 = vld [vmem:[%s3 + $0x48] sm:$0xff]
        %v1058 = vld [vmem:[%s3 + $0x50] sm:$0xff]
        %v1059 = vld [vmem:[%s3 + $0x58] sm:$0xff]
        %v1060 = vld [vmem:[%s3 + $0x60] sm:$0xff]
        %v1061 = vld [vmem:[%s3 + $0x68] sm:$0xff]
        %v1062 = vld [vmem:[%s3 + $0x70] sm:$0xff]
        %v1063 = vld [vmem:[%s3 + $0x78] sm:$0xff]
        %v1064 = vld [vmem:[%s3 + $0x80] sm:$0xff]
        %v1065 = vld [vmem:[%s3 + $0x88] sm:$0xff]
        %v1066 = vld [vmem:[%s3 + $0x90] sm:$0xff]
        %v1067 = vld [vmem:[%s3 + $0x98] sm:$0xff]
        %v1068 = vld [vmem:[%s3 + $0xa0] sm:$0xff]
        %v1069 = vld [vmem:[%s3 + $0xa8] sm:$0xff]
        %v1070 = vld [vmem:[%s3 + $0xb0] sm:$0xff]
        %v1071 = vld [vmem:[%s3 + $0xb8] sm:$0xff]
        %v1072 = vld [vmem:[#allocation5] sm:$0xff]
        %v1073 = vld [vmem:[#allocation5 + $0x8] sm:$0xff]
        %v1074 = vld [vmem:[#allocation5 + $0x10] sm:$0xff]
        %v1075 = vld [vmem:[#allocation5 + $0x18] sm:$0xff]
        %v1076 = vld [vmem:[#allocation5 + $0x20] sm:$0xff]
        %v1077 = vld [vmem:[#allocation5 + $0x28] sm:$0xff]
        %v1078 = vld [vmem:[#allocation5 + $0x30] sm:$0xff]
        %v1079 = vld [vmem:[#allocation5 + $0x38] sm:$0xff]
        %1081 = vset.pattern.permute.xlu0 0
        %1082 = vperm.xlu0 %1081, %v1072
        %v1083 = vpop.permute.xlu0 %1082
        %1086 = vset.pattern.permute.xlu0 0
        %1087 = vperm.xlu0 %1086, %v1073
        %v1088 = vpop.permute.xlu0 %1087
        %1091 = vset.pattern.permute.xlu0 0
        %1092 = vperm.xlu0 %1091, %v1074
        %v1093 = vpop.permute.xlu0 %1092
        %1096 = vset.pattern.permute.xlu0 0
        %1097 = vperm.xlu0 %1096, %v1075
        %v1098 = vpop.permute.xlu0 %1097
        %1101 = vset.pattern.permute.xlu0 0
        %1102 = vperm.xlu0 %1101, %v1076
        %v1103 = vpop.permute.xlu0 %1102
        %1106 = vset.pattern.permute.xlu0 0
        %1107 = vperm.xlu0 %1106, %v1077
        %v1108 = vpop.permute.xlu0 %1107
        %1111 = vset.pattern.permute.xlu0 0
        %1112 = vperm.xlu0 %1111, %v1078
        %v1113 = vpop.permute.xlu0 %1112
        %1116 = vset.pattern.permute.xlu0 0
        %1117 = vperm.xlu0 %1116, %v1079
        %v1118 = vpop.permute.xlu0 %1117
        %vm1120 = vcmask 261120
        %v1122 = vsel %vm1120, %v1050, 0
        %v1125 = vsel %vm1120, %v1053, 0
        %v1128 = vsel %vm1120, %v1056, 0
        %v1131 = vsel %vm1120, %v1059, 0
        %v1134 = vsel %vm1120, %v1062, 0
        %v1137 = vsel %vm1120, %v1065, 0
        %v1140 = vsel %vm1120, %v1068, 0
        %v1143 = vsel %vm1120, %v1071, 0
        %1145 = vmatpush.msra.mxu0 %v1011
        %1146 = vmatpush.msra.mxu0 %v1009
        %1147 = vmatpush.msra.mxu0 %v1007
        %1148 = vmatpush.msra.mxu0 %v1005
        %1149 = vmatpush.msra.mxu0 %v895
        %1150 = vmatpush.msra.mxu0 %v892
        %1151 = vmatpush.msra.mxu0 %v889
        %1152 = vmatpush.msra.mxu0 %v886
        %1153 = vmatpush.msra.mxu0 %v995
        %1154 = vmatpush.msra.mxu0 %v993
        %1155 = vmatpush.msra.mxu0 %v991
        %1156 = vmatpush.msra.mxu0 %v989
        %1157 = vmatpush.msra.mxu0 %v866
        %1158 = vmatpush.msra.mxu0 %v863
        %1159 = vmatpush.msra.mxu0 %v860
        %1160 = vmatpush.msra.mxu0 %v857
        %1161 = vmatmul.f32.gmra.mxu0 %v1048
        %v1162 = vpop.f32.mrf.mxu0
        %v1163 = vadd.f32 %v1083, %v1162
        %1164 = vmatmul.f32.gmra.mxu0 %v1051
        %v1165 = vpop.f32.mrf.mxu0
        %v1166 = vadd.f32 %v1088, %v1165
        %1167 = vmatmul.f32.gmra.mxu0 %v1054
        %v1168 = vpop.f32.mrf.mxu0
        %v1169 = vadd.f32 %v1093, %v1168
        %1170 = vmatmul.f32.gmra.mxu0 %v1057
        %v1171 = vpop.f32.mrf.mxu0
        %v1172 = vadd.f32 %v1098, %v1171
        %1173 = vmatmul.f32.gmra.mxu0 %v1060
        %v1174 = vpop.f32.mrf.mxu0
        %v1175 = vadd.f32 %v1103, %v1174
        %1176 = vmatmul.f32.gmra.mxu0 %v1063
        %v1177 = vpop.f32.mrf.mxu0
        %v1178 = vadd.f32 %v1108, %v1177
        %1179 = vmatmul.f32.gmra.mxu0 %v1066
        %v1180 = vpop.f32.mrf.mxu0
        %v1181 = vadd.f32 %v1113, %v1180
        %1182 = vmatmul.f32.gmra.mxu0 %v1069
        %v1183 = vpop.f32.mrf.mxu0
        %v1184 = vadd.f32 %v1118, %v1183
        %1185 = vdwg.mxu0
        %1186 = vmatpush.msra.mxu0 %v1043
        %1187 = vmatpush.msra.mxu0 %v1041
        %1188 = vmatpush.msra.mxu0 %v1039
        %1189 = vmatpush.msra.mxu0 %v1037
        %1190 = vmatpush.msra.mxu0 %v953
        %1191 = vmatpush.msra.mxu0 %v950
        %1192 = vmatpush.msra.mxu0 %v947
        %1193 = vmatpush.msra.mxu0 %v944
        %1194 = vmatpush.msra.mxu0 %v1027
        %1195 = vmatpush.msra.mxu0 %v1025
        %1196 = vmatpush.msra.mxu0 %v1023
        %1197 = vmatpush.msra.mxu0 %v1021
        %1198 = vmatpush.msra.mxu0 %v924
        %1199 = vmatpush.msra.mxu0 %v921
        %1200 = vmatpush.msra.mxu0 %v918
        %1201 = vmatpush.msra.mxu0 %v915
        %1202 = vmatmul.f32.gmra.mxu0 %v1049
        %v1203 = vpop.f32.mrf.mxu0
        %v1204 = vadd.f32 %v1163, %v1203
        %1205 = vmatmul.f32.gmra.mxu0 %v1052
        %v1206 = vpop.f32.mrf.mxu0
        %v1207 = vadd.f32 %v1166, %v1206
        %1208 = vmatmul.f32.gmra.mxu0 %v1055
        %v1209 = vpop.f32.mrf.mxu0
        %v1210 = vadd.f32 %v1169, %v1209
        %1211 = vmatmul.f32.gmra.mxu0 %v1058
        %v1212 = vpop.f32.mrf.mxu0
        %v1213 = vadd.f32 %v1172, %v1212
        %1214 = vmatmul.f32.gmra.mxu0 %v1061
        %v1215 = vpop.f32.mrf.mxu0
        %v1216 = vadd.f32 %v1175, %v1215
        %1217 = vmatmul.f32.gmra.mxu0 %v1064
        %v1218 = vpop.f32.mrf.mxu0
        %v1219 = vadd.f32 %v1178, %v1218
        %1220 = vmatmul.f32.gmra.mxu0 %v1067
        %v1221 = vpop.f32.mrf.mxu0
        %v1222 = vadd.f32 %v1181, %v1221
        %1223 = vmatmul.f32.gmra.mxu0 %v1070
        %v1224 = vpop.f32.mrf.mxu0
        %v1225 = vadd.f32 %v1184, %v1224
        %1226 = vdwg.mxu0
        %1227 = vmatpush.msra.mxu0 0.0
        %1228 = vmatpush.msra.mxu0 0.0
        %1229 = vmatpush.msra.mxu0 0.0
        %1230 = vmatpush.msra.mxu0 0.0
        %1231 = vmatpush.msra.mxu0 0.0
        %1232 = vmatpush.msra.mxu0 0.0
        %1233 = vmatpush.msra.mxu0 0.0
        %1234 = vmatpush.msra.mxu0 0.0
        %1235 = vmatpush.msra.mxu0 0.0
        %1236 = vmatpush.msra.mxu0 0.0
        %1237 = vmatpush.msra.mxu0 0.0
        %1238 = vmatpush.msra.mxu0 0.0
        %1239 = vmatpush.msra.mxu0 %v982
        %1240 = vmatpush.msra.mxu0 %v979
        %1241 = vmatpush.msra.mxu0 %v976
        %1242 = vmatpush.msra.mxu0 %v973
        %1243 = vmatmul.f32.gmra.mxu0 %v1122
        %v1244 = vpop.f32.mrf.mxu0
        %v1245 = vadd.f32 %v1204, %v1244
        %1246 = vmatmul.f32.gmra.mxu0 %v1125
        %v1247 = vpop.f32.mrf.mxu0
        %v1248 = vadd.f32 %v1207, %v1247
        %1249 = vmatmul.f32.gmra.mxu0 %v1128
        %v1250 = vpop.f32.mrf.mxu0
        %v1251 = vadd.f32 %v1210, %v1250
        %1252 = vmatmul.f32.gmra.mxu0 %v1131
        %v1253 = vpop.f32.mrf.mxu0
        %v1254 = vadd.f32 %v1213, %v1253
        %1255 = vmatmul.f32.gmra.mxu0 %v1134
        %v1256 = vpop.f32.mrf.mxu0
        %v1257 = vadd.f32 %v1216, %v1256
        %1258 = vmatmul.f32.gmra.mxu0 %v1137
        %v1259 = vpop.f32.mrf.mxu0
        %v1260 = vadd.f32 %v1219, %v1259
        %1261 = vmatmul.f32.gmra.mxu0 %v1140
        %v1262 = vpop.f32.mrf.mxu0
        %v1263 = vadd.f32 %v1222, %v1262
        %1264 = vmatmul.f32.gmra.mxu0 %v1143
        %v1265 = vpop.f32.mrf.mxu0
        %v1266 = vadd.f32 %v1225, %v1265
        %1267 = vdwg.mxu0
        %vm1268 = vcmp.gt.f32.partialorder %v1245, 0.0
        %vm1269 = vcmp.gt.f32.partialorder %v1248, 0.0
        %vm1270 = vcmp.gt.f32.partialorder %v1251, 0.0
        %vm1271 = vcmp.gt.f32.partialorder %v1254, 0.0
        %vm1272 = vcmp.gt.f32.partialorder %v1257, 0.0
        %vm1273 = vcmp.gt.f32.partialorder %v1260, 0.0
        %vm1274 = vcmp.gt.f32.partialorder %v1263, 0.0
        %vm1275 = vcmp.gt.f32.partialorder %v1266, 0.0
        %v1276 = vmul.f32 %v1245, 0.1
        %v1277 = vmul.f32 %v1248, 0.1
        %v1278 = vmul.f32 %v1251, 0.1
        %v1279 = vmul.f32 %v1254, 0.1
        %v1280 = vmul.f32 %v1257, 0.1
        %v1281 = vmul.f32 %v1260, 0.1
        %v1282 = vmul.f32 %v1263, 0.1
        %v1283 = vmul.f32 %v1266, 0.1
        %v1284 = vsel %vm1268, %v1245, %v1276
        %v1285 = vsel %vm1269, %v1248, %v1277
        %v1286 = vsel %vm1270, %v1251, %v1278
        %v1287 = vsel %vm1271, %v1254, %v1279
        %v1288 = vsel %vm1272, %v1257, %v1280
        %v1289 = vsel %vm1273, %v1260, %v1281
        %v1290 = vsel %vm1274, %v1263, %v1282
        %v1291 = vsel %vm1275, %v1266, %v1283
        %v1292 = vld [vmem:[#allocation7] sm:$0xff]
        %v1293 = vld [vmem:[#allocation7 + $0x8] sm:$0xff]
        %v1294 = vld [vmem:[#allocation7 + $0x10] sm:$0xff]
        %v1295 = vld [vmem:[#allocation7 + $0x18] sm:$0xff]
        %v1296 = vld [vmem:[#allocation7 + $0x20] sm:$0xff]
        %v1297 = vld [vmem:[#allocation7 + $0x28] sm:$0xff]
        %v1298 = vld [vmem:[#allocation7 + $0x30] sm:$0xff]
        %v1299 = vld [vmem:[#allocation7 + $0x38] sm:$0xff]
        %v1301 = vsel %vm826, %v1284, 0
        %v1304 = vsel %vm826, %v1285, 0
        %v1307 = vsel %vm826, %v1286, 0
        %v1310 = vsel %vm826, %v1287, 0
        %v1313 = vsel %vm826, %v1288, 0
        %v1316 = vsel %vm826, %v1289, 0
        %v1319 = vsel %vm826, %v1290, 0
        %v1322 = vsel %vm826, %v1291, 0
        %1324 = vmatpush.msra.mxu0 0.0
        %1325 = vmatpush.msra.mxu0 0.0
        %1326 = vmatpush.msra.mxu0 0.0
        %1327 = vmatpush.msra.mxu0 0.0
        %1328 = vmatpush.msra.mxu0 0.0
        %1329 = vmatpush.msra.mxu0 0.0
        %1330 = vmatpush.msra.mxu0 0.0
        %1331 = vmatpush.msra.mxu0 0.0
        %1332 = vmatpush.msra.mxu0 %v1299
        %1333 = vmatpush.msra.mxu0 %v1298
        %1334 = vmatpush.msra.mxu0 %v1297
        %1335 = vmatpush.msra.mxu0 %v1296
        %1336 = vmatpush.msra.mxu0 %v1295
        %1337 = vmatpush.msra.mxu0 %v1294
        %1338 = vmatpush.msra.mxu0 %v1293
        %1339 = vmatpush.msra.mxu0 %v1292
        %1340 = vmatmul.f32.gmra.mxu0 %v1301
        %v1341 = vpop.f32.mrf.mxu0
        %v1342 = vadd.f32 0.0, %v1341
        %1343 = vmatmul.f32.gmra.mxu0 %v1304
        %v1344 = vpop.f32.mrf.mxu0
        %v1345 = vadd.f32 0.0, %v1344
        %1346 = vmatmul.f32.gmra.mxu0 %v1307
        %v1347 = vpop.f32.mrf.mxu0
        %v1348 = vadd.f32 0.0, %v1347
        %1349 = vmatmul.f32.gmra.mxu0 %v1310
        %v1350 = vpop.f32.mrf.mxu0
        %v1351 = vadd.f32 0.0, %v1350
        %1352 = vmatmul.f32.gmra.mxu0 %v1313
        %v1353 = vpop.f32.mrf.mxu0
        %v1354 = vadd.f32 0.0, %v1353
        %1355 = vmatmul.f32.gmra.mxu0 %v1316
        %v1356 = vpop.f32.mrf.mxu0
        %v1357 = vadd.f32 0.0, %v1356
        %1358 = vmatmul.f32.gmra.mxu0 %v1319
        %v1359 = vpop.f32.mrf.mxu0
        %v1360 = vadd.f32 0.0, %v1359
        %1361 = vmatmul.f32.gmra.mxu0 %v1322
        %v1362 = vpop.f32.mrf.mxu0
        %v1363 = vadd.f32 0.0, %v1362
        %1364 = vdwg.mxu0
        %1373 = vrot.lane.b32.xlu0 %v1342, 112
        %v1374 = vpop.permute.xlu0 %1373
        %1375 = vrot.lane.b32.xlu0 %v1345, 112
        %v1376 = vpop.permute.xlu0 %1375
        %1377 = vrot.lane.b32.xlu0 %v1348, 112
        %v1378 = vpop.permute.xlu0 %1377
        %1379 = vrot.lane.b32.xlu0 %v1351, 112
        %v1380 = vpop.permute.xlu0 %1379
        %1381 = vrot.lane.b32.xlu0 %v1354, 112
        %v1382 = vpop.permute.xlu0 %1381
        %1383 = vrot.lane.b32.xlu0 %v1357, 112
        %v1384 = vpop.permute.xlu0 %1383
        %1385 = vrot.lane.b32.xlu0 %v1360, 112
        %v1386 = vpop.permute.xlu0 %1385
        %1387 = vrot.lane.b32.xlu0 %v1363, 112
        %v1388 = vpop.permute.xlu0 %1387
        %1397 = vrot.lane.b32.xlu0 %v1342, 96
        %v1398 = vpop.permute.xlu0 %1397
        %1399 = vrot.lane.b32.xlu0 %v1345, 96
        %v1400 = vpop.permute.xlu0 %1399
        %1401 = vrot.lane.b32.xlu0 %v1348, 96
        %v1402 = vpop.permute.xlu0 %1401
        %1403 = vrot.lane.b32.xlu0 %v1351, 96
        %v1404 = vpop.permute.xlu0 %1403
        %1405 = vrot.lane.b32.xlu0 %v1354, 96
        %v1406 = vpop.permute.xlu0 %1405
        %1407 = vrot.lane.b32.xlu0 %v1357, 96
        %v1408 = vpop.permute.xlu0 %1407
        %1409 = vrot.lane.b32.xlu0 %v1360, 96
        %v1410 = vpop.permute.xlu0 %1409
        %1411 = vrot.lane.b32.xlu0 %v1363, 96
        %v1412 = vpop.permute.xlu0 %1411
        %1421 = vrot.lane.b32.xlu0 %v1342, 80
        %v1422 = vpop.permute.xlu0 %1421
        %1423 = vrot.lane.b32.xlu0 %v1345, 80
        %v1424 = vpop.permute.xlu0 %1423
        %1425 = vrot.lane.b32.xlu0 %v1348, 80
        %v1426 = vpop.permute.xlu0 %1425
        %1427 = vrot.lane.b32.xlu0 %v1351, 80
        %v1428 = vpop.permute.xlu0 %1427
        %1429 = vrot.lane.b32.xlu0 %v1354, 80
        %v1430 = vpop.permute.xlu0 %1429
        %1431 = vrot.lane.b32.xlu0 %v1357, 80
        %v1432 = vpop.permute.xlu0 %1431
        %1433 = vrot.lane.b32.xlu0 %v1360, 80
        %v1434 = vpop.permute.xlu0 %1433
        %1435 = vrot.lane.b32.xlu0 %v1363, 80
        %v1436 = vpop.permute.xlu0 %1435
        %v1445 = vld [vmem:[#allocation8] sm:$0xff]
        %v1446 = vld [vmem:[#allocation8 + $0x8] sm:$0xff]
        %v1447 = vld [vmem:[#allocation8 + $0x10] sm:$0xff]
        %v1448 = vld [vmem:[#allocation8 + $0x18] sm:$0xff]
        %v1449 = vld [vmem:[#allocation8 + $0x20] sm:$0xff]
        %v1450 = vld [vmem:[#allocation8 + $0x28] sm:$0xff]
        %v1451 = vld [vmem:[#allocation8 + $0x30] sm:$0xff]
        %v1452 = vld [vmem:[#allocation8 + $0x38] sm:$0xff]
        %v1453 = vld [vmem:[#allocation8 + $0x40] sm:$0xff]
        %v1454 = vld [vmem:[#allocation8 + $0x48] sm:$0xff]
        %v1455 = vld [vmem:[#allocation8 + $0x50] sm:$0xff]
        %v1456 = vld [vmem:[#allocation8 + $0x58] sm:$0xff]
        %v1457 = vld [vmem:[#allocation8 + $0x60] sm:$0xff]
        %v1458 = vld [vmem:[#allocation8 + $0x68] sm:$0xff]
        %v1459 = vld [vmem:[#allocation8 + $0x70] sm:$0xff]
        %v1460 = vld [vmem:[#allocation8 + $0x78] sm:$0xff]
        %v1461 = vld [vmem:[#allocation10] sm:$0xff]
        %v1462 = vld [vmem:[#allocation10 + $0x8] sm:$0xff]
        %v1463 = vld [vmem:[#allocation10 + $0x10] sm:$0xff]
        %v1464 = vld [vmem:[#allocation10 + $0x18] sm:$0xff]
        %v1465 = vld [vmem:[#allocation10 + $0x20] sm:$0xff]
        %v1466 = vld [vmem:[#allocation10 + $0x28] sm:$0xff]
        %v1467 = vld [vmem:[#allocation10 + $0x30] sm:$0xff]
        %v1468 = vld [vmem:[#allocation10 + $0x38] sm:$0xff]
        %1470 = vset.pattern.permute.xlu0 0
        %1471 = vperm.xlu0 %1470, %v1461
        %v1472 = vpop.permute.xlu0 %1471
        %1475 = vset.pattern.permute.xlu0 0
        %1476 = vperm.xlu0 %1475, %v1462
        %v1477 = vpop.permute.xlu0 %1476
        %1480 = vset.pattern.permute.xlu0 0
        %1481 = vperm.xlu0 %1480, %v1463
        %v1482 = vpop.permute.xlu0 %1481
        %1485 = vset.pattern.permute.xlu0 0
        %1486 = vperm.xlu0 %1485, %v1464
        %v1487 = vpop.permute.xlu0 %1486
        %1490 = vset.pattern.permute.xlu0 0
        %1491 = vperm.xlu0 %1490, %v1465
        %v1492 = vpop.permute.xlu0 %1491
        %1495 = vset.pattern.permute.xlu0 0
        %1496 = vperm.xlu0 %1495, %v1466
        %v1497 = vpop.permute.xlu0 %1496
        %1500 = vset.pattern.permute.xlu0 0
        %1501 = vperm.xlu0 %1500, %v1467
        %v1502 = vpop.permute.xlu0 %1501
        %1505 = vset.pattern.permute.xlu0 0
        %1506 = vperm.xlu0 %1505, %v1468
        %v1507 = vpop.permute.xlu0 %1506
        %1509 = vmatpush.msra.mxu0 %v1388
        %1510 = vmatpush.msra.mxu0 %v1386
        %1511 = vmatpush.msra.mxu0 %v1384
        %1512 = vmatpush.msra.mxu0 %v1382
        %1513 = vmatpush.msra.mxu0 %v1380
        %1514 = vmatpush.msra.mxu0 %v1378
        %1515 = vmatpush.msra.mxu0 %v1376
        %1516 = vmatpush.msra.mxu0 %v1374
        %1517 = vmatpush.msra.mxu0 %v1363
        %1518 = vmatpush.msra.mxu0 %v1360
        %1519 = vmatpush.msra.mxu0 %v1357
        %1520 = vmatpush.msra.mxu0 %v1354
        %1521 = vmatpush.msra.mxu0 %v1351
        %1522 = vmatpush.msra.mxu0 %v1348
        %1523 = vmatpush.msra.mxu0 %v1345
        %1524 = vmatpush.msra.mxu0 %v1342
        %1525 = vmatmul.f32.gmra.mxu0 %v1445
        %v1526 = vpop.f32.mrf.mxu0
        %v1527 = vadd.f32 %v1472, %v1526
        %1528 = vmatmul.f32.gmra.mxu0 %v1447
        %v1529 = vpop.f32.mrf.mxu0
        %v1530 = vadd.f32 %v1477, %v1529
        %1531 = vmatmul.f32.gmra.mxu0 %v1449
        %v1532 = vpop.f32.mrf.mxu0
        %v1533 = vadd.f32 %v1482, %v1532
        %1534 = vmatmul.f32.gmra.mxu0 %v1451
        %v1535 = vpop.f32.mrf.mxu0
        %v1536 = vadd.f32 %v1487, %v1535
        %1537 = vmatmul.f32.gmra.mxu0 %v1453
        %v1538 = vpop.f32.mrf.mxu0
        %v1539 = vadd.f32 %v1492, %v1538
        %1540 = vmatmul.f32.gmra.mxu0 %v1455
        %v1541 = vpop.f32.mrf.mxu0
        %v1542 = vadd.f32 %v1497, %v1541
        %1543 = vmatmul.f32.gmra.mxu0 %v1457
        %v1544 = vpop.f32.mrf.mxu0
        %v1545 = vadd.f32 %v1502, %v1544
        %1546 = vmatmul.f32.gmra.mxu0 %v1459
        %v1547 = vpop.f32.mrf.mxu0
        %v1548 = vadd.f32 %v1507, %v1547
        %1549 = vdwg.mxu0
        %1550 = vmatpush.msra.mxu0 %v1436
        %1551 = vmatpush.msra.mxu0 %v1434
        %1552 = vmatpush.msra.mxu0 %v1432
        %1553 = vmatpush.msra.mxu0 %v1430
        %1554 = vmatpush.msra.mxu0 %v1428
        %1555 = vmatpush.msra.mxu0 %v1426
        %1556 = vmatpush.msra.mxu0 %v1424
        %1557 = vmatpush.msra.mxu0 %v1422
        %1558 = vmatpush.msra.mxu0 %v1412
        %1559 = vmatpush.msra.mxu0 %v1410
        %1560 = vmatpush.msra.mxu0 %v1408
        %1561 = vmatpush.msra.mxu0 %v1406
        %1562 = vmatpush.msra.mxu0 %v1404
        %1563 = vmatpush.msra.mxu0 %v1402
        %1564 = vmatpush.msra.mxu0 %v1400
        %1565 = vmatpush.msra.mxu0 %v1398
        %1566 = vmatmul.f32.gmra.mxu0 %v1446
        %v1567 = vpop.f32.mrf.mxu0
        %v1568 = vadd.f32 %v1527, %v1567
        %1569 = vmatmul.f32.gmra.mxu0 %v1448
        %v1570 = vpop.f32.mrf.mxu0
        %v1571 = vadd.f32 %v1530, %v1570
        %1572 = vmatmul.f32.gmra.mxu0 %v1450
        %v1573 = vpop.f32.mrf.mxu0
        %v1574 = vadd.f32 %v1533, %v1573
        %1575 = vmatmul.f32.gmra.mxu0 %v1452
        %v1576 = vpop.f32.mrf.mxu0
        %v1577 = vadd.f32 %v1536, %v1576
        %1578 = vmatmul.f32.gmra.mxu0 %v1454
        %v1579 = vpop.f32.mrf.mxu0
        %v1580 = vadd.f32 %v1539, %v1579
        %1581 = vmatmul.f32.gmra.mxu0 %v1456
        %v1582 = vpop.f32.mrf.mxu0
        %v1583 = vadd.f32 %v1542, %v1582
        %1584 = vmatmul.f32.gmra.mxu0 %v1458
        %v1585 = vpop.f32.mrf.mxu0
        %v1586 = vadd.f32 %v1545, %v1585
        %1587 = vmatmul.f32.gmra.mxu0 %v1460
        %v1588 = vpop.f32.mrf.mxu0
        %v1589 = vadd.f32 %v1548, %v1588
        %1590 = vdwg.mxu0
        %vm1591 = vcmp.gt.f32.partialorder %v1568, 0.0
        %vm1592 = vcmp.gt.f32.partialorder %v1571, 0.0
        %vm1593 = vcmp.gt.f32.partialorder %v1574, 0.0
        %vm1594 = vcmp.gt.f32.partialorder %v1577, 0.0
        %vm1595 = vcmp.gt.f32.partialorder %v1580, 0.0
        %vm1596 = vcmp.gt.f32.partialorder %v1583, 0.0
        %vm1597 = vcmp.gt.f32.partialorder %v1586, 0.0
        %vm1598 = vcmp.gt.f32.partialorder %v1589, 0.0
        %v1599 = vmul.f32 %v1568, 0.1
        %v1600 = vmul.f32 %v1571, 0.1
        %v1601 = vmul.f32 %v1574, 0.1
        %v1602 = vmul.f32 %v1577, 0.1
        %v1603 = vmul.f32 %v1580, 0.1
        %v1604 = vmul.f32 %v1583, 0.1
        %v1605 = vmul.f32 %v1586, 0.1
        %v1606 = vmul.f32 %v1589, 0.1
        %v1607 = vsel %vm1591, %v1568, %v1599
        %v1608 = vsel %vm1592, %v1571, %v1600
        %v1609 = vsel %vm1593, %v1574, %v1601
        %v1610 = vsel %vm1594, %v1577, %v1602
        %v1611 = vsel %vm1595, %v1580, %v1603
        %v1612 = vsel %vm1596, %v1583, %v1604
        %v1613 = vsel %vm1597, %v1586, %v1605
        %v1614 = vsel %vm1598, %v1589, %v1606
        %v1615 = vld [vmem:[#allocation11] sm:$0xff]
        %v1616 = vld [vmem:[#allocation11 + $0x8] sm:$0xff]
        %vm1617 = vcmask 130048
        %v1619 = vsel %vm1617, %v1607, 0
        %v1622 = vsel %vm1617, %v1608, 0
        %v1625 = vsel %vm1617, %v1609, 0
        %v1628 = vsel %vm1617, %v1610, 0
        %v1631 = vsel %vm1617, %v1611, 0
        %v1634 = vsel %vm1617, %v1612, 0
        %v1637 = vsel %vm1617, %v1613, 0
        %v1640 = vsel %vm1617, %v1614, 0
        %1642 = vmatpush.msra.mxu0 0.0
        %1643 = vmatpush.msra.mxu0 0.0
        %1644 = vmatpush.msra.mxu0 0.0
        %1645 = vmatpush.msra.mxu0 0.0
        %1646 = vmatpush.msra.mxu0 0.0
        %1647 = vmatpush.msra.mxu0 0.0
        %1648 = vmatpush.msra.mxu0 0.0
        %1649 = vmatpush.msra.mxu0 0.0
        %1650 = vmatpush.msra.mxu0 0.0
        %1651 = vmatpush.msra.mxu0 0.0
        %1652 = vmatpush.msra.mxu0 0.0
        %1653 = vmatpush.msra.mxu0 0.0
        %1654 = vmatpush.msra.mxu0 0.0
        %1655 = vmatpush.msra.mxu0 0.0
        %1656 = vmatpush.msra.mxu0 %v1616
        %1657 = vmatpush.msra.mxu0 %v1615
        %1658 = vmatmul.f32.gmra.mxu0 %v1619
        %v1659 = vpop.f32.mrf.mxu0
        %v1660 = vadd.f32 0.0, %v1659
        %1661 = vmatmul.f32.gmra.mxu0 %v1622
        %v1662 = vpop.f32.mrf.mxu0
        %v1663 = vadd.f32 0.0, %v1662
        %1664 = vmatmul.f32.gmra.mxu0 %v1625
        %v1665 = vpop.f32.mrf.mxu0
        %v1666 = vadd.f32 0.0, %v1665
        %1667 = vmatmul.f32.gmra.mxu0 %v1628
        %v1668 = vpop.f32.mrf.mxu0
        %v1669 = vadd.f32 0.0, %v1668
        %1670 = vmatmul.f32.gmra.mxu0 %v1631
        %v1671 = vpop.f32.mrf.mxu0
        %v1672 = vadd.f32 0.0, %v1671
        %1673 = vmatmul.f32.gmra.mxu0 %v1634
        %v1674 = vpop.f32.mrf.mxu0
        %v1675 = vadd.f32 0.0, %v1674
        %1676 = vmatmul.f32.gmra.mxu0 %v1637
        %v1677 = vpop.f32.mrf.mxu0
        %v1678 = vadd.f32 0.0, %v1677
        %1679 = vmatmul.f32.gmra.mxu0 %v1640
        %v1680 = vpop.f32.mrf.mxu0
        %v1681 = vadd.f32 0.0, %v1680
        %1682 = vdwg.mxu0
        %1691 = vrot.lane.b32.xlu0 %v1660, 112
        %v1692 = vpop.permute.xlu0 %1691
        %1693 = vrot.lane.b32.xlu0 %v1663, 112
        %v1694 = vpop.permute.xlu0 %1693
        %1695 = vrot.lane.b32.xlu0 %v1666, 112
        %v1696 = vpop.permute.xlu0 %1695
        %1697 = vrot.lane.b32.xlu0 %v1669, 112
        %v1698 = vpop.permute.xlu0 %1697
        %1699 = vrot.lane.b32.xlu0 %v1672, 112
        %v1700 = vpop.permute.xlu0 %1699
        %1701 = vrot.lane.b32.xlu0 %v1675, 112
        %v1702 = vpop.permute.xlu0 %1701
        %1703 = vrot.lane.b32.xlu0 %v1678, 112
        %v1704 = vpop.permute.xlu0 %1703
        %1705 = vrot.lane.b32.xlu0 %v1681, 112
        %v1706 = vpop.permute.xlu0 %1705
        %1715 = vrot.lane.b32.xlu0 %v1660, 96
        %v1716 = vpop.permute.xlu0 %1715
        %1717 = vrot.lane.b32.xlu0 %v1663, 96
        %v1718 = vpop.permute.xlu0 %1717
        %1719 = vrot.lane.b32.xlu0 %v1666, 96
        %v1720 = vpop.permute.xlu0 %1719
        %1721 = vrot.lane.b32.xlu0 %v1669, 96
        %v1722 = vpop.permute.xlu0 %1721
        %1723 = vrot.lane.b32.xlu0 %v1672, 96
        %v1724 = vpop.permute.xlu0 %1723
        %1725 = vrot.lane.b32.xlu0 %v1675, 96
        %v1726 = vpop.permute.xlu0 %1725
        %1727 = vrot.lane.b32.xlu0 %v1678, 96
        %v1728 = vpop.permute.xlu0 %1727
        %1729 = vrot.lane.b32.xlu0 %v1681, 96
        %v1730 = vpop.permute.xlu0 %1729
        %1739 = vrot.lane.b32.xlu0 %v1660, 80
        %v1740 = vpop.permute.xlu0 %1739
        %1741 = vrot.lane.b32.xlu0 %v1663, 80
        %v1742 = vpop.permute.xlu0 %1741
        %1743 = vrot.lane.b32.xlu0 %v1666, 80
        %v1744 = vpop.permute.xlu0 %1743
        %1745 = vrot.lane.b32.xlu0 %v1669, 80
        %v1746 = vpop.permute.xlu0 %1745
        %1747 = vrot.lane.b32.xlu0 %v1672, 80
        %v1748 = vpop.permute.xlu0 %1747
        %1749 = vrot.lane.b32.xlu0 %v1675, 80
        %v1750 = vpop.permute.xlu0 %1749
        %1751 = vrot.lane.b32.xlu0 %v1678, 80
        %v1752 = vpop.permute.xlu0 %1751
        %1753 = vrot.lane.b32.xlu0 %v1681, 80
        %v1754 = vpop.permute.xlu0 %1753
        %v1763 = vld [vmem:[#allocation13] sm:$0xff]
        %v1764 = vld [vmem:[#allocation13 + $0x8] sm:$0xff]
        %v1765 = vld [vmem:[#allocation13 + $0x10] sm:$0xff]
        %v1766 = vld [vmem:[#allocation13 + $0x18] sm:$0xff]
        %v1767 = vld [vmem:[#allocation13 + $0x20] sm:$0xff]
        %v1768 = vld [vmem:[#allocation13 + $0x28] sm:$0xff]
        %v1769 = vld [vmem:[#allocation13 + $0x30] sm:$0xff]
        %v1770 = vld [vmem:[#allocation13 + $0x38] sm:$0xff]
        %v1771 = vld [vmem:[#allocation13 + $0x40] sm:$0xff]
        %v1772 = vld [vmem:[#allocation13 + $0x48] sm:$0xff]
        %v1773 = vld [vmem:[#allocation13 + $0x50] sm:$0xff]
        %v1774 = vld [vmem:[#allocation13 + $0x58] sm:$0xff]
        %v1775 = vld [vmem:[#allocation13 + $0x60] sm:$0xff]
        %v1776 = vld [vmem:[#allocation13 + $0x68] sm:$0xff]
        %v1777 = vld [vmem:[#allocation13 + $0x70] sm:$0xff]
        %v1778 = vld [vmem:[#allocation13 + $0x78] sm:$0xff]
        %v1779 = vld [vmem:[#allocation14] sm:$0xff]
        %v1780 = vld [vmem:[#allocation14 + $0x8] sm:$0xff]
        %v1781 = vld [vmem:[#allocation14 + $0x10] sm:$0xff]
        %v1782 = vld [vmem:[#allocation14 + $0x18] sm:$0xff]
        %v1783 = vld [vmem:[#allocation14 + $0x20] sm:$0xff]
        %v1784 = vld [vmem:[#allocation14 + $0x28] sm:$0xff]
        %v1785 = vld [vmem:[#allocation14 + $0x30] sm:$0xff]
        %v1786 = vld [vmem:[#allocation14 + $0x38] sm:$0xff]
        %1788 = vset.pattern.permute.xlu0 0
        %1789 = vperm.xlu0 %1788, %v1779
        %v1790 = vpop.permute.xlu0 %1789
        %1793 = vset.pattern.permute.xlu0 0
        %1794 = vperm.xlu0 %1793, %v1780
        %v1795 = vpop.permute.xlu0 %1794
        %1798 = vset.pattern.permute.xlu0 0
        %1799 = vperm.xlu0 %1798, %v1781
        %v1800 = vpop.permute.xlu0 %1799
        %1803 = vset.pattern.permute.xlu0 0
        %1804 = vperm.xlu0 %1803, %v1782
        %v1805 = vpop.permute.xlu0 %1804
        %1808 = vset.pattern.permute.xlu0 0
        %1809 = vperm.xlu0 %1808, %v1783
        %v1810 = vpop.permute.xlu0 %1809
        %1813 = vset.pattern.permute.xlu0 0
        %1814 = vperm.xlu0 %1813, %v1784
        %v1815 = vpop.permute.xlu0 %1814
        %1818 = vset.pattern.permute.xlu0 0
        %1819 = vperm.xlu0 %1818, %v1785
        %v1820 = vpop.permute.xlu0 %1819
        %1823 = vset.pattern.permute.xlu0 0
        %1824 = vperm.xlu0 %1823, %v1786
        %v1825 = vpop.permute.xlu0 %1824
        %1827 = vmatpush.msra.mxu0 %v1706
        %1828 = vmatpush.msra.mxu0 %v1704
        %1829 = vmatpush.msra.mxu0 %v1702
        %1830 = vmatpush.msra.mxu0 %v1700
        %1831 = vmatpush.msra.mxu0 %v1698
        %1832 = vmatpush.msra.mxu0 %v1696
        %1833 = vmatpush.msra.mxu0 %v1694
        %1834 = vmatpush.msra.mxu0 %v1692
        %1835 = vmatpush.msra.mxu0 %v1681
        %1836 = vmatpush.msra.mxu0 %v1678
        %1837 = vmatpush.msra.mxu0 %v1675
        %1838 = vmatpush.msra.mxu0 %v1672
        %1839 = vmatpush.msra.mxu0 %v1669
        %1840 = vmatpush.msra.mxu0 %v1666
        %1841 = vmatpush.msra.mxu0 %v1663
        %1842 = vmatpush.msra.mxu0 %v1660
        %1843 = vmatmul.f32.gmra.mxu0 %v1763
        %v1844 = vpop.f32.mrf.mxu0
        %v1845 = vadd.f32 %v1790, %v1844
        %1846 = vmatmul.f32.gmra.mxu0 %v1765
        %v1847 = vpop.f32.mrf.mxu0
        %v1848 = vadd.f32 %v1795, %v1847
        %1849 = vmatmul.f32.gmra.mxu0 %v1767
        %v1850 = vpop.f32.mrf.mxu0
        %v1851 = vadd.f32 %v1800, %v1850
        %1852 = vmatmul.f32.gmra.mxu0 %v1769
        %v1853 = vpop.f32.mrf.mxu0
        %v1854 = vadd.f32 %v1805, %v1853
        %1855 = vmatmul.f32.gmra.mxu0 %v1771
        %v1856 = vpop.f32.mrf.mxu0
        %v1857 = vadd.f32 %v1810, %v1856
        %1858 = vmatmul.f32.gmra.mxu0 %v1773
        %v1859 = vpop.f32.mrf.mxu0
        %v1860 = vadd.f32 %v1815, %v1859
        %1861 = vmatmul.f32.gmra.mxu0 %v1775
        %v1862 = vpop.f32.mrf.mxu0
        %v1863 = vadd.f32 %v1820, %v1862
        %1864 = vmatmul.f32.gmra.mxu0 %v1777
        %v1865 = vpop.f32.mrf.mxu0
        %v1866 = vadd.f32 %v1825, %v1865
        %1867 = vdwg.mxu0
        %1868 = vmatpush.msra.mxu0 %v1754
        %1869 = vmatpush.msra.mxu0 %v1752
        %1870 = vmatpush.msra.mxu0 %v1750
        %1871 = vmatpush.msra.mxu0 %v1748
        %1872 = vmatpush.msra.mxu0 %v1746
        %1873 = vmatpush.msra.mxu0 %v1744
        %1874 = vmatpush.msra.mxu0 %v1742
        %1875 = vmatpush.msra.mxu0 %v1740
        %1876 = vmatpush.msra.mxu0 %v1730
        %1877 = vmatpush.msra.mxu0 %v1728
        %1878 = vmatpush.msra.mxu0 %v1726
        %1879 = vmatpush.msra.mxu0 %v1724
        %1880 = vmatpush.msra.mxu0 %v1722
        %1881 = vmatpush.msra.mxu0 %v1720
        %1882 = vmatpush.msra.mxu0 %v1718
        %1883 = vmatpush.msra.mxu0 %v1716
        %1884 = vmatmul.f32.gmra.mxu0 %v1764
        %v1885 = vpop.f32.mrf.mxu0
        %v1886 = vadd.f32 %v1845, %v1885
        %1887 = vmatmul.f32.gmra.mxu0 %v1766
        %v1888 = vpop.f32.mrf.mxu0
        %v1889 = vadd.f32 %v1848, %v1888
        %1890 = vmatmul.f32.gmra.mxu0 %v1768
        %v1891 = vpop.f32.mrf.mxu0
        %v1892 = vadd.f32 %v1851, %v1891
        %1893 = vmatmul.f32.gmra.mxu0 %v1770
        %v1894 = vpop.f32.mrf.mxu0
        %v1895 = vadd.f32 %v1854, %v1894
        %1896 = vmatmul.f32.gmra.mxu0 %v1772
        %v1897 = vpop.f32.mrf.mxu0
        %v1898 = vadd.f32 %v1857, %v1897
        %1899 = vmatmul.f32.gmra.mxu0 %v1774
        %v1900 = vpop.f32.mrf.mxu0
        %v1901 = vadd.f32 %v1860, %v1900
        %1902 = vmatmul.f32.gmra.mxu0 %v1776
        %v1903 = vpop.f32.mrf.mxu0
        %v1904 = vadd.f32 %v1863, %v1903
        %1905 = vmatmul.f32.gmra.mxu0 %v1778
        %v1906 = vpop.f32.mrf.mxu0
        %v1907 = vadd.f32 %v1866, %v1906
        %1908 = vdwg.mxu0
        %vm1909 = vcmp.gt.f32.partialorder %v1886, 0.0
        %vm1910 = vcmp.gt.f32.partialorder %v1889, 0.0
        %vm1911 = vcmp.gt.f32.partialorder %v1892, 0.0
        %vm1912 = vcmp.gt.f32.partialorder %v1895, 0.0
        %vm1913 = vcmp.gt.f32.partialorder %v1898, 0.0
        %vm1914 = vcmp.gt.f32.partialorder %v1901, 0.0
        %vm1915 = vcmp.gt.f32.partialorder %v1904, 0.0
        %vm1916 = vcmp.gt.f32.partialorder %v1907, 0.0
        %v1917 = vmul.f32 %v1886, 0.1
        %v1918 = vmul.f32 %v1889, 0.1
        %v1919 = vmul.f32 %v1892, 0.1
        %v1920 = vmul.f32 %v1895, 0.1
        %v1921 = vmul.f32 %v1898, 0.1
        %v1922 = vmul.f32 %v1901, 0.1
        %v1923 = vmul.f32 %v1904, 0.1
        %v1924 = vmul.f32 %v1907, 0.1
        %v1925 = vsel %vm1909, %v1886, %v1917
        %v1926 = vsel %vm1910, %v1889, %v1918
        %v1927 = vsel %vm1911, %v1892, %v1919
        %v1928 = vsel %vm1912, %v1895, %v1920
        %v1929 = vsel %vm1913, %v1898, %v1921
        %v1930 = vsel %vm1914, %v1901, %v1922
        %v1931 = vsel %vm1915, %v1904, %v1923
        %v1932 = vsel %vm1916, %v1907, %v1924
        %v1933 = vld [vmem:[#allocation16] sm:$0xff]
        %v1934 = vld [vmem:[#allocation16 + $0x8] sm:$0xff]
        %v1936 = vsel %vm1617, %v1925, 0
        %v1939 = vsel %vm1617, %v1926, 0
        %v1942 = vsel %vm1617, %v1927, 0
        %v1945 = vsel %vm1617, %v1928, 0
        %v1948 = vsel %vm1617, %v1929, 0
        %v1951 = vsel %vm1617, %v1930, 0
        %v1954 = vsel %vm1617, %v1931, 0
        %v1957 = vsel %vm1617, %v1932, 0
        %1959 = vmatpush.msra.mxu0 0.0
        %1960 = vmatpush.msra.mxu0 0.0
        %1961 = vmatpush.msra.mxu0 0.0
        %1962 = vmatpush.msra.mxu0 0.0
        %1963 = vmatpush.msra.mxu0 0.0
        %1964 = vmatpush.msra.mxu0 0.0
        %1965 = vmatpush.msra.mxu0 0.0
        %1966 = vmatpush.msra.mxu0 0.0
        %1967 = vmatpush.msra.mxu0 0.0
        %1968 = vmatpush.msra.mxu0 0.0
        %1969 = vmatpush.msra.mxu0 0.0
        %1970 = vmatpush.msra.mxu0 0.0
        %1971 = vmatpush.msra.mxu0 0.0
        %1972 = vmatpush.msra.mxu0 0.0
        %1973 = vmatpush.msra.mxu0 %v1934
        %1974 = vmatpush.msra.mxu0 %v1933
        %1975 = vmatmul.f32.gmra.mxu0 %v1936
        %v1976 = vpop.f32.mrf.mxu0
        %v1977 = vadd.f32 0.0, %v1976
        %1978 = vmatmul.f32.gmra.mxu0 %v1939
        %v1979 = vpop.f32.mrf.mxu0
        %v1980 = vadd.f32 0.0, %v1979
        %1981 = vmatmul.f32.gmra.mxu0 %v1942
        %v1982 = vpop.f32.mrf.mxu0
        %v1983 = vadd.f32 0.0, %v1982
        %1984 = vmatmul.f32.gmra.mxu0 %v1945
        %v1985 = vpop.f32.mrf.mxu0
        %v1986 = vadd.f32 0.0, %v1985
        %1987 = vmatmul.f32.gmra.mxu0 %v1948
        %v1988 = vpop.f32.mrf.mxu0
        %v1989 = vadd.f32 0.0, %v1988
        %1990 = vmatmul.f32.gmra.mxu0 %v1951
        %v1991 = vpop.f32.mrf.mxu0
        %v1992 = vadd.f32 0.0, %v1991
        %1993 = vmatmul.f32.gmra.mxu0 %v1954
        %v1994 = vpop.f32.mrf.mxu0
        %v1995 = vadd.f32 0.0, %v1994
        %1996 = vmatmul.f32.gmra.mxu0 %v1957
        %v1997 = vpop.f32.mrf.mxu0
        %v1998 = vadd.f32 0.0, %v1997
        %1999 = vdwg.mxu0
        %2008 = vrot.lane.b32.xlu0 %v1977, 112
        %v2009 = vpop.permute.xlu0 %2008
        %2010 = vrot.lane.b32.xlu0 %v1980, 112
        %v2011 = vpop.permute.xlu0 %2010
        %2012 = vrot.lane.b32.xlu0 %v1983, 112
        %v2013 = vpop.permute.xlu0 %2012
        %2014 = vrot.lane.b32.xlu0 %v1986, 112
        %v2015 = vpop.permute.xlu0 %2014
        %2016 = vrot.lane.b32.xlu0 %v1989, 112
        %v2017 = vpop.permute.xlu0 %2016
        %2018 = vrot.lane.b32.xlu0 %v1992, 112
        %v2019 = vpop.permute.xlu0 %2018
        %2020 = vrot.lane.b32.xlu0 %v1995, 112
        %v2021 = vpop.permute.xlu0 %2020
        %2022 = vrot.lane.b32.xlu0 %v1998, 112
        %v2023 = vpop.permute.xlu0 %2022
        %2032 = vrot.lane.b32.xlu0 %v1977, 96
        %v2033 = vpop.permute.xlu0 %2032
        %2034 = vrot.lane.b32.xlu0 %v1980, 96
        %v2035 = vpop.permute.xlu0 %2034
        %2036 = vrot.lane.b32.xlu0 %v1983, 96
        %v2037 = vpop.permute.xlu0 %2036
        %2038 = vrot.lane.b32.xlu0 %v1986, 96
        %v2039 = vpop.permute.xlu0 %2038
        %2040 = vrot.lane.b32.xlu0 %v1989, 96
        %v2041 = vpop.permute.xlu0 %2040
        %2042 = vrot.lane.b32.xlu0 %v1992, 96
        %v2043 = vpop.permute.xlu0 %2042
        %2044 = vrot.lane.b32.xlu0 %v1995, 96
        %v2045 = vpop.permute.xlu0 %2044
        %2046 = vrot.lane.b32.xlu0 %v1998, 96
        %v2047 = vpop.permute.xlu0 %2046
        %2056 = vrot.lane.b32.xlu0 %v1977, 80
        %v2057 = vpop.permute.xlu0 %2056
        %2058 = vrot.lane.b32.xlu0 %v1980, 80
        %v2059 = vpop.permute.xlu0 %2058
        %2060 = vrot.lane.b32.xlu0 %v1983, 80
        %v2061 = vpop.permute.xlu0 %2060
        %2062 = vrot.lane.b32.xlu0 %v1986, 80
        %v2063 = vpop.permute.xlu0 %2062
        %2064 = vrot.lane.b32.xlu0 %v1989, 80
        %v2065 = vpop.permute.xlu0 %2064
        %2066 = vrot.lane.b32.xlu0 %v1992, 80
        %v2067 = vpop.permute.xlu0 %2066
        %2068 = vrot.lane.b32.xlu0 %v1995, 80
        %v2069 = vpop.permute.xlu0 %2068
        %2070 = vrot.lane.b32.xlu0 %v1998, 80
        %v2071 = vpop.permute.xlu0 %2070
        %v2080 = vld [vmem:[#allocation17] sm:$0xff]
        %v2081 = vld [vmem:[#allocation17 + $0x8] sm:$0xff]
        %v2082 = vld [vmem:[#allocation17 + $0x10] sm:$0xff]
        %v2083 = vld [vmem:[#allocation17 + $0x18] sm:$0xff]
        %v2084 = vld [vmem:[#allocation17 + $0x20] sm:$0xff]
        %v2085 = vld [vmem:[#allocation17 + $0x28] sm:$0xff]
        %v2086 = vld [vmem:[#allocation17 + $0x30] sm:$0xff]
        %v2087 = vld [vmem:[#allocation17 + $0x38] sm:$0xff]
        %v2088 = vld [vmem:[#allocation17 + $0x40] sm:$0xff]
        %v2089 = vld [vmem:[#allocation17 + $0x48] sm:$0xff]
        %v2090 = vld [vmem:[#allocation17 + $0x50] sm:$0xff]
        %v2091 = vld [vmem:[#allocation17 + $0x58] sm:$0xff]
        %v2092 = vld [vmem:[#allocation17 + $0x60] sm:$0xff]
        %v2093 = vld [vmem:[#allocation17 + $0x68] sm:$0xff]
        %v2094 = vld [vmem:[#allocation17 + $0x70] sm:$0xff]
        %v2095 = vld [vmem:[#allocation17 + $0x78] sm:$0xff]
        %v2096 = vld [vmem:[#allocation19] sm:$0xff]
        %v2097 = vld [vmem:[#allocation19 + $0x8] sm:$0xff]
        %v2098 = vld [vmem:[#allocation19 + $0x10] sm:$0xff]
        %v2099 = vld [vmem:[#allocation19 + $0x18] sm:$0xff]
        %v2100 = vld [vmem:[#allocation19 + $0x20] sm:$0xff]
        %v2101 = vld [vmem:[#allocation19 + $0x28] sm:$0xff]
        %v2102 = vld [vmem:[#allocation19 + $0x30] sm:$0xff]
        %v2103 = vld [vmem:[#allocation19 + $0x38] sm:$0xff]
        %2105 = vset.pattern.permute.xlu0 0
        %2106 = vperm.xlu0 %2105, %v2096
        %v2107 = vpop.permute.xlu0 %2106
        %2110 = vset.pattern.permute.xlu0 0
        %2111 = vperm.xlu0 %2110, %v2097
        %v2112 = vpop.permute.xlu0 %2111
        %2115 = vset.pattern.permute.xlu0 0
        %2116 = vperm.xlu0 %2115, %v2098
        %v2117 = vpop.permute.xlu0 %2116
        %2120 = vset.pattern.permute.xlu0 0
        %2121 = vperm.xlu0 %2120, %v2099
        %v2122 = vpop.permute.xlu0 %2121
        %2125 = vset.pattern.permute.xlu0 0
        %2126 = vperm.xlu0 %2125, %v2100
        %v2127 = vpop.permute.xlu0 %2126
        %2130 = vset.pattern.permute.xlu0 0
        %2131 = vperm.xlu0 %2130, %v2101
        %v2132 = vpop.permute.xlu0 %2131
        %2135 = vset.pattern.permute.xlu0 0
        %2136 = vperm.xlu0 %2135, %v2102
        %v2137 = vpop.permute.xlu0 %2136
        %2140 = vset.pattern.permute.xlu0 0
        %2141 = vperm.xlu0 %2140, %v2103
        %v2142 = vpop.permute.xlu0 %2141
        %2144 = vmatpush.msra.mxu0 %v2023
        %2145 = vmatpush.msra.mxu0 %v2021
        %2146 = vmatpush.msra.mxu0 %v2019
        %2147 = vmatpush.msra.mxu0 %v2017
        %2148 = vmatpush.msra.mxu0 %v2015
        %2149 = vmatpush.msra.mxu0 %v2013
        %2150 = vmatpush.msra.mxu0 %v2011
        %2151 = vmatpush.msra.mxu0 %v2009
        %2152 = vmatpush.msra.mxu0 %v1998
        %2153 = vmatpush.msra.mxu0 %v1995
        %2154 = vmatpush.msra.mxu0 %v1992
        %2155 = vmatpush.msra.mxu0 %v1989
        %2156 = vmatpush.msra.mxu0 %v1986
        %2157 = vmatpush.msra.mxu0 %v1983
        %2158 = vmatpush.msra.mxu0 %v1980
        %2159 = vmatpush.msra.mxu0 %v1977
        %2160 = vmatmul.f32.gmra.mxu0 %v2080
        %v2161 = vpop.f32.mrf.mxu0
        %v2162 = vadd.f32 %v2107, %v2161
        %2163 = vmatmul.f32.gmra.mxu0 %v2082
        %v2164 = vpop.f32.mrf.mxu0
        %v2165 = vadd.f32 %v2112, %v2164
        %2166 = vmatmul.f32.gmra.mxu0 %v2084
        %v2167 = vpop.f32.mrf.mxu0
        %v2168 = vadd.f32 %v2117, %v2167
        %2169 = vmatmul.f32.gmra.mxu0 %v2086
        %v2170 = vpop.f32.mrf.mxu0
        %v2171 = vadd.f32 %v2122, %v2170
        %2172 = vmatmul.f32.gmra.mxu0 %v2088
        %v2173 = vpop.f32.mrf.mxu0
        %v2174 = vadd.f32 %v2127, %v2173
        %2175 = vmatmul.f32.gmra.mxu0 %v2090
        %v2176 = vpop.f32.mrf.mxu0
        %v2177 = vadd.f32 %v2132, %v2176
        %2178 = vmatmul.f32.gmra.mxu0 %v2092
        %v2179 = vpop.f32.mrf.mxu0
        %v2180 = vadd.f32 %v2137, %v2179
        %2181 = vmatmul.f32.gmra.mxu0 %v2094
        %v2182 = vpop.f32.mrf.mxu0
        %v2183 = vadd.f32 %v2142, %v2182
        %2184 = vdwg.mxu0
        %2185 = vmatpush.msra.mxu0 %v2071
        %2186 = vmatpush.msra.mxu0 %v2069
        %2187 = vmatpush.msra.mxu0 %v2067
        %2188 = vmatpush.msra.mxu0 %v2065
        %2189 = vmatpush.msra.mxu0 %v2063
        %2190 = vmatpush.msra.mxu0 %v2061
        %2191 = vmatpush.msra.mxu0 %v2059
        %2192 = vmatpush.msra.mxu0 %v2057
        %2193 = vmatpush.msra.mxu0 %v2047
        %2194 = vmatpush.msra.mxu0 %v2045
        %2195 = vmatpush.msra.mxu0 %v2043
        %2196 = vmatpush.msra.mxu0 %v2041
        %2197 = vmatpush.msra.mxu0 %v2039
        %2198 = vmatpush.msra.mxu0 %v2037
        %2199 = vmatpush.msra.mxu0 %v2035
        %2200 = vmatpush.msra.mxu0 %v2033
        %2201 = vmatmul.f32.gmra.mxu0 %v2081
        %v2202 = vpop.f32.mrf.mxu0
        %v2203 = vadd.f32 %v2162, %v2202
        %2204 = vmatmul.f32.gmra.mxu0 %v2083
        %v2205 = vpop.f32.mrf.mxu0
        %v2206 = vadd.f32 %v2165, %v2205
        %2207 = vmatmul.f32.gmra.mxu0 %v2085
        %v2208 = vpop.f32.mrf.mxu0
        %v2209 = vadd.f32 %v2168, %v2208
        %2210 = vmatmul.f32.gmra.mxu0 %v2087
        %v2211 = vpop.f32.mrf.mxu0
        %v2212 = vadd.f32 %v2171, %v2211
        %2213 = vmatmul.f32.gmra.mxu0 %v2089
        %v2214 = vpop.f32.mrf.mxu0
        %v2215 = vadd.f32 %v2174, %v2214
        %2216 = vmatmul.f32.gmra.mxu0 %v2091
        %v2217 = vpop.f32.mrf.mxu0
        %v2218 = vadd.f32 %v2177, %v2217
        %2219 = vmatmul.f32.gmra.mxu0 %v2093
        %v2220 = vpop.f32.mrf.mxu0
        %v2221 = vadd.f32 %v2180, %v2220
        %2222 = vmatmul.f32.gmra.mxu0 %v2095
        %v2223 = vpop.f32.mrf.mxu0
        %v2224 = vadd.f32 %v2183, %v2223
        %2225 = vdwg.mxu0
        %vm2226 = vcmp.gt.f32.partialorder %v2203, 0.0
        %vm2227 = vcmp.gt.f32.partialorder %v2206, 0.0
        %vm2228 = vcmp.gt.f32.partialorder %v2209, 0.0
        %vm2229 = vcmp.gt.f32.partialorder %v2212, 0.0
        %vm2230 = vcmp.gt.f32.partialorder %v2215, 0.0
        %vm2231 = vcmp.gt.f32.partialorder %v2218, 0.0
        %vm2232 = vcmp.gt.f32.partialorder %v2221, 0.0
        %vm2233 = vcmp.gt.f32.partialorder %v2224, 0.0
        %v2234 = vmul.f32 %v2203, 0.1
        %v2235 = vmul.f32 %v2206, 0.1
        %v2236 = vmul.f32 %v2209, 0.1
        %v2237 = vmul.f32 %v2212, 0.1
        %v2238 = vmul.f32 %v2215, 0.1
        %v2239 = vmul.f32 %v2218, 0.1
        %v2240 = vmul.f32 %v2221, 0.1
        %v2241 = vmul.f32 %v2224, 0.1
        %v2242 = vsel %vm2226, %v2203, %v2234
        %v2243 = vsel %vm2227, %v2206, %v2235
        %v2244 = vsel %vm2228, %v2209, %v2236
        %v2245 = vsel %vm2229, %v2212, %v2237
        %v2246 = vsel %vm2230, %v2215, %v2238
        %v2247 = vsel %vm2231, %v2218, %v2239
        %v2248 = vsel %vm2232, %v2221, %v2240
        %v2249 = vsel %vm2233, %v2224, %v2241
        %v2250 = vld [vmem:[#allocation20] sm:$0xff]
        %v2251 = vld [vmem:[#allocation20 + $0x8] sm:$0xff]
        %v2253 = vsel %vm1617, %v2242, 0
        %v2256 = vsel %vm1617, %v2243, 0
        %v2259 = vsel %vm1617, %v2244, 0
        %v2262 = vsel %vm1617, %v2245, 0
        %v2265 = vsel %vm1617, %v2246, 0
        %v2268 = vsel %vm1617, %v2247, 0
        %v2271 = vsel %vm1617, %v2248, 0
        %v2274 = vsel %vm1617, %v2249, 0
        %2276 = vmatpush.msra.mxu0 0.0
        %2277 = vmatpush.msra.mxu0 0.0
        %2278 = vmatpush.msra.mxu0 0.0
        %2279 = vmatpush.msra.mxu0 0.0
        %2280 = vmatpush.msra.mxu0 0.0
        %2281 = vmatpush.msra.mxu0 0.0
        %2282 = vmatpush.msra.mxu0 0.0
        %2283 = vmatpush.msra.mxu0 0.0
        %2284 = vmatpush.msra.mxu0 0.0
        %2285 = vmatpush.msra.mxu0 0.0
        %2286 = vmatpush.msra.mxu0 0.0
        %2287 = vmatpush.msra.mxu0 0.0
        %2288 = vmatpush.msra.mxu0 0.0
        %2289 = vmatpush.msra.mxu0 0.0
        %2290 = vmatpush.msra.mxu0 %v2251
        %2291 = vmatpush.msra.mxu0 %v2250
        %2292 = vmatmul.f32.gmra.mxu0 %v2253
        %v2293 = vpop.f32.mrf.mxu0
        %v2294 = vadd.f32 0.0, %v2293
        %2295 = vmatmul.f32.gmra.mxu0 %v2256
        %v2296 = vpop.f32.mrf.mxu0
        %v2297 = vadd.f32 0.0, %v2296
        %2298 = vmatmul.f32.gmra.mxu0 %v2259
        %v2299 = vpop.f32.mrf.mxu0
        %v2300 = vadd.f32 0.0, %v2299
        %2301 = vmatmul.f32.gmra.mxu0 %v2262
        %v2302 = vpop.f32.mrf.mxu0
        %v2303 = vadd.f32 0.0, %v2302
        %2304 = vmatmul.f32.gmra.mxu0 %v2265
        %v2305 = vpop.f32.mrf.mxu0
        %v2306 = vadd.f32 0.0, %v2305
        %2307 = vmatmul.f32.gmra.mxu0 %v2268
        %v2308 = vpop.f32.mrf.mxu0
        %v2309 = vadd.f32 0.0, %v2308
        %2310 = vmatmul.f32.gmra.mxu0 %v2271
        %v2311 = vpop.f32.mrf.mxu0
        %v2312 = vadd.f32 0.0, %v2311
        %2313 = vmatmul.f32.gmra.mxu0 %v2274
        %v2314 = vpop.f32.mrf.mxu0
        %v2315 = vadd.f32 0.0, %v2314
        %2316 = vdwg.mxu0
        %2325 = vrot.lane.b32.xlu0 %v2294, 112
        %v2326 = vpop.permute.xlu0 %2325
        %2327 = vrot.lane.b32.xlu0 %v2297, 112
        %v2328 = vpop.permute.xlu0 %2327
        %2329 = vrot.lane.b32.xlu0 %v2300, 112
        %v2330 = vpop.permute.xlu0 %2329
        %2331 = vrot.lane.b32.xlu0 %v2303, 112
        %v2332 = vpop.permute.xlu0 %2331
        %2333 = vrot.lane.b32.xlu0 %v2306, 112
        %v2334 = vpop.permute.xlu0 %2333
        %2335 = vrot.lane.b32.xlu0 %v2309, 112
        %v2336 = vpop.permute.xlu0 %2335
        %2337 = vrot.lane.b32.xlu0 %v2312, 112
        %v2338 = vpop.permute.xlu0 %2337
        %2339 = vrot.lane.b32.xlu0 %v2315, 112
        %v2340 = vpop.permute.xlu0 %2339
        %2349 = vrot.lane.b32.xlu0 %v2294, 96
        %v2350 = vpop.permute.xlu0 %2349
        %2351 = vrot.lane.b32.xlu0 %v2297, 96
        %v2352 = vpop.permute.xlu0 %2351
        %2353 = vrot.lane.b32.xlu0 %v2300, 96
        %v2354 = vpop.permute.xlu0 %2353
        %2355 = vrot.lane.b32.xlu0 %v2303, 96
        %v2356 = vpop.permute.xlu0 %2355
        %2357 = vrot.lane.b32.xlu0 %v2306, 96
        %v2358 = vpop.permute.xlu0 %2357
        %2359 = vrot.lane.b32.xlu0 %v2309, 96
        %v2360 = vpop.permute.xlu0 %2359
        %2361 = vrot.lane.b32.xlu0 %v2312, 96
        %v2362 = vpop.permute.xlu0 %2361
        %2363 = vrot.lane.b32.xlu0 %v2315, 96
        %v2364 = vpop.permute.xlu0 %2363
        %2373 = vrot.lane.b32.xlu0 %v2294, 80
        %v2374 = vpop.permute.xlu0 %2373
        %2375 = vrot.lane.b32.xlu0 %v2297, 80
        %v2376 = vpop.permute.xlu0 %2375
        %2377 = vrot.lane.b32.xlu0 %v2300, 80
        %v2378 = vpop.permute.xlu0 %2377
        %2379 = vrot.lane.b32.xlu0 %v2303, 80
        %v2380 = vpop.permute.xlu0 %2379
        %2381 = vrot.lane.b32.xlu0 %v2306, 80
        %v2382 = vpop.permute.xlu0 %2381
        %2383 = vrot.lane.b32.xlu0 %v2309, 80
        %v2384 = vpop.permute.xlu0 %2383
        %2385 = vrot.lane.b32.xlu0 %v2312, 80
        %v2386 = vpop.permute.xlu0 %2385
        %2387 = vrot.lane.b32.xlu0 %v2315, 80
        %v2388 = vpop.permute.xlu0 %2387
        %v2397 = vld [vmem:[#allocation22] sm:$0xff]
        %v2398 = vld [vmem:[#allocation22 + $0x8] sm:$0xff]
        %v2399 = vld [vmem:[#allocation22 + $0x10] sm:$0xff]
        %v2400 = vld [vmem:[#allocation22 + $0x18] sm:$0xff]
        %v2401 = vld [vmem:[#allocation22 + $0x20] sm:$0xff]
        %v2402 = vld [vmem:[#allocation22 + $0x28] sm:$0xff]
        %v2403 = vld [vmem:[#allocation22 + $0x30] sm:$0xff]
        %v2404 = vld [vmem:[#allocation22 + $0x38] sm:$0xff]
        %v2405 = vld [vmem:[#allocation22 + $0x40] sm:$0xff]
        %v2406 = vld [vmem:[#allocation22 + $0x48] sm:$0xff]
        %v2407 = vld [vmem:[#allocation22 + $0x50] sm:$0xff]
        %v2408 = vld [vmem:[#allocation22 + $0x58] sm:$0xff]
        %v2409 = vld [vmem:[#allocation22 + $0x60] sm:$0xff]
        %v2410 = vld [vmem:[#allocation22 + $0x68] sm:$0xff]
        %v2411 = vld [vmem:[#allocation22 + $0x70] sm:$0xff]
        %v2412 = vld [vmem:[#allocation22 + $0x78] sm:$0xff]
        %v2413 = vld [vmem:[#allocation22 + $0x80] sm:$0xff]
        %v2414 = vld [vmem:[#allocation22 + $0x88] sm:$0xff]
        %v2415 = vld [vmem:[#allocation22 + $0x90] sm:$0xff]
        %v2416 = vld [vmem:[#allocation22 + $0x98] sm:$0xff]
        %v2417 = vld [vmem:[#allocation22 + $0xa0] sm:$0xff]
        %v2418 = vld [vmem:[#allocation22 + $0xa8] sm:$0xff]
        %v2419 = vld [vmem:[#allocation22 + $0xb0] sm:$0xff]
        %v2420 = vld [vmem:[#allocation22 + $0xb8] sm:$0xff]
        %v2421 = vld [vmem:[#allocation22 + $0xc0] sm:$0xff]
        %v2422 = vld [vmem:[#allocation22 + $0xc8] sm:$0xff]
        %v2423 = vld [vmem:[#allocation22 + $0xd0] sm:$0xff]
        %v2424 = vld [vmem:[#allocation22 + $0xd8] sm:$0xff]
        %v2425 = vld [vmem:[#allocation22 + $0xe0] sm:$0xff]
        %v2426 = vld [vmem:[#allocation22 + $0xe8] sm:$0xff]
        %v2427 = vld [vmem:[#allocation22 + $0xf0] sm:$0xff]
        %v2428 = vld [vmem:[#allocation22 + $0xf8] sm:$0xff]
        %2430 = vset.pattern.permute.xlu0 0
        %2431 = vperm.xlu0 %2430, %v2397
        %v2432 = vpop.permute.xlu0 %2431
        %2435 = vset.pattern.permute.xlu0 0
        %2436 = vperm.xlu0 %2435, %v2398
        %v2437 = vpop.permute.xlu0 %2436
        %2440 = vset.pattern.permute.xlu0 0
        %2441 = vperm.xlu0 %2440, %v2399
        %v2442 = vpop.permute.xlu0 %2441
        %2445 = vset.pattern.permute.xlu0 0
        %2446 = vperm.xlu0 %2445, %v2400
        %v2447 = vpop.permute.xlu0 %2446
        %2450 = vset.pattern.permute.xlu0 0
        %2451 = vperm.xlu0 %2450, %v2401
        %v2452 = vpop.permute.xlu0 %2451
        %2455 = vset.pattern.permute.xlu0 0
        %2456 = vperm.xlu0 %2455, %v2402
        %v2457 = vpop.permute.xlu0 %2456
        %2460 = vset.pattern.permute.xlu0 0
        %2461 = vperm.xlu0 %2460, %v2403
        %v2462 = vpop.permute.xlu0 %2461
        %2465 = vset.pattern.permute.xlu0 0
        %2466 = vperm.xlu0 %2465, %v2404
        %v2467 = vpop.permute.xlu0 %2466
        %2470 = vset.pattern.permute.xlu0 0
        %2471 = vperm.xlu0 %2470, %v2405
        %v2472 = vpop.permute.xlu0 %2471
        %2475 = vset.pattern.permute.xlu0 0
        %2476 = vperm.xlu0 %2475, %v2406
        %v2477 = vpop.permute.xlu0 %2476
        %2480 = vset.pattern.permute.xlu0 0
        %2481 = vperm.xlu0 %2480, %v2407
        %v2482 = vpop.permute.xlu0 %2481
        %2485 = vset.pattern.permute.xlu0 0
        %2486 = vperm.xlu0 %2485, %v2408
        %v2487 = vpop.permute.xlu0 %2486
        %2490 = vset.pattern.permute.xlu0 0
        %2491 = vperm.xlu0 %2490, %v2409
        %v2492 = vpop.permute.xlu0 %2491
        %2495 = vset.pattern.permute.xlu0 0
        %2496 = vperm.xlu0 %2495, %v2410
        %v2497 = vpop.permute.xlu0 %2496
        %2500 = vset.pattern.permute.xlu0 0
        %2501 = vperm.xlu0 %2500, %v2411
        %v2502 = vpop.permute.xlu0 %2501
        %2505 = vset.pattern.permute.xlu0 0
        %2506 = vperm.xlu0 %2505, %v2412
        %v2507 = vpop.permute.xlu0 %2506
        %2510 = vset.pattern.permute.xlu0 0
        %2511 = vperm.xlu0 %2510, %v2413
        %v2512 = vpop.permute.xlu0 %2511
        %2515 = vset.pattern.permute.xlu0 0
        %2516 = vperm.xlu0 %2515, %v2414
        %v2517 = vpop.permute.xlu0 %2516
        %2520 = vset.pattern.permute.xlu0 0
        %2521 = vperm.xlu0 %2520, %v2415
        %v2522 = vpop.permute.xlu0 %2521
        %2525 = vset.pattern.permute.xlu0 0
        %2526 = vperm.xlu0 %2525, %v2416
        %v2527 = vpop.permute.xlu0 %2526
        %2530 = vset.pattern.permute.xlu0 0
        %2531 = vperm.xlu0 %2530, %v2417
        %v2532 = vpop.permute.xlu0 %2531
        %2535 = vset.pattern.permute.xlu0 0
        %2536 = vperm.xlu0 %2535, %v2418
        %v2537 = vpop.permute.xlu0 %2536
        %2540 = vset.pattern.permute.xlu0 0
        %2541 = vperm.xlu0 %2540, %v2419
        %v2542 = vpop.permute.xlu0 %2541
        %2545 = vset.pattern.permute.xlu0 0
        %2546 = vperm.xlu0 %2545, %v2420
        %v2547 = vpop.permute.xlu0 %2546
        %2550 = vset.pattern.permute.xlu0 0
        %2551 = vperm.xlu0 %2550, %v2421
        %v2552 = vpop.permute.xlu0 %2551
        %2555 = vset.pattern.permute.xlu0 0
        %2556 = vperm.xlu0 %2555, %v2422
        %v2557 = vpop.permute.xlu0 %2556
        %2560 = vset.pattern.permute.xlu0 0
        %2561 = vperm.xlu0 %2560, %v2423
        %v2562 = vpop.permute.xlu0 %2561
        %2565 = vset.pattern.permute.xlu0 0
        %2566 = vperm.xlu0 %2565, %v2424
        %v2567 = vpop.permute.xlu0 %2566
        %2570 = vset.pattern.permute.xlu0 0
        %2571 = vperm.xlu0 %2570, %v2425
        %v2572 = vpop.permute.xlu0 %2571
        %2575 = vset.pattern.permute.xlu0 0
        %2576 = vperm.xlu0 %2575, %v2426
        %v2577 = vpop.permute.xlu0 %2576
        %2580 = vset.pattern.permute.xlu0 0
        %2581 = vperm.xlu0 %2580, %v2427
        %v2582 = vpop.permute.xlu0 %2581
        %2585 = vset.pattern.permute.xlu0 0
        %2586 = vperm.xlu0 %2585, %v2428
        %v2587 = vpop.permute.xlu0 %2586
        %v2589 = vmul.f32 %v2294, %v2432
        %v2590 = vmul.f32 %v2297, %v2437
        %v2591 = vmul.f32 %v2300, %v2442
        %v2592 = vmul.f32 %v2303, %v2447
        %v2593 = vmul.f32 %v2306, %v2452
        %v2594 = vmul.f32 %v2309, %v2457
        %v2595 = vmul.f32 %v2312, %v2462
        %v2596 = vmul.f32 %v2315, %v2467
        %v2597 = vmul.f32 %v2326, %v2472
        %v2598 = vmul.f32 %v2328, %v2477
        %v2599 = vmul.f32 %v2330, %v2482
        %v2600 = vmul.f32 %v2332, %v2487
        %v2601 = vmul.f32 %v2334, %v2492
        %v2602 = vmul.f32 %v2336, %v2497
        %v2603 = vmul.f32 %v2338, %v2502
        %v2604 = vmul.f32 %v2340, %v2507
        %v2605 = vmul.f32 %v2350, %v2512
        %v2606 = vmul.f32 %v2352, %v2517
        %v2607 = vmul.f32 %v2354, %v2522
        %v2608 = vmul.f32 %v2356, %v2527
        %v2609 = vmul.f32 %v2358, %v2532
        %v2610 = vmul.f32 %v2360, %v2537
        %v2611 = vmul.f32 %v2362, %v2542
        %v2612 = vmul.f32 %v2364, %v2547
        %v2613 = vmul.f32 %v2374, %v2552
        %v2614 = vmul.f32 %v2376, %v2557
        %v2615 = vmul.f32 %v2378, %v2562
        %v2616 = vmul.f32 %v2380, %v2567
        %v2617 = vmul.f32 %v2382, %v2572
        %v2618 = vmul.f32 %v2384, %v2577
        %v2619 = vmul.f32 %v2386, %v2582
        %v2620 = vmul.f32 %v2388, %v2587
        %v2621 = vsel %vm1617, %v2589, 0.0
        %v2622 = vsel %vm1617, %v2590, 0.0
        %v2623 = vadd.f32 %v2621, %v2622
        %v2624 = vsel %vm1617, %v2591, 0.0
        %v2625 = vadd.f32 %v2623, %v2624
        %v2626 = vsel %vm1617, %v2592, 0.0
        %v2627 = vadd.f32 %v2625, %v2626
        %v2628 = vsel %vm1617, %v2593, 0.0
        %v2629 = vadd.f32 %v2627, %v2628
        %v2630 = vsel %vm1617, %v2594, 0.0
        %v2631 = vadd.f32 %v2629, %v2630
        %v2632 = vsel %vm1617, %v2595, 0.0
        %v2633 = vadd.f32 %v2631, %v2632
        %v2634 = vsel %vm1617, %v2596, 0.0
        %v2635 = vadd.f32 %v2633, %v2634
        %v2636 = vsel %vm1617, %v2597, 0.0
        %v2637 = vadd.f32 %v2635, %v2636
        %v2638 = vsel %vm1617, %v2598, 0.0
        %v2639 = vadd.f32 %v2637, %v2638
        %v2640 = vsel %vm1617, %v2599, 0.0
        %v2641 = vadd.f32 %v2639, %v2640
        %v2642 = vsel %vm1617, %v2600, 0.0
        %v2643 = vadd.f32 %v2641, %v2642
        %v2644 = vsel %vm1617, %v2601, 0.0
        %v2645 = vadd.f32 %v2643, %v2644
        %v2646 = vsel %vm1617, %v2602, 0.0
        %v2647 = vadd.f32 %v2645, %v2646
        %v2648 = vsel %vm1617, %v2603, 0.0
        %v2649 = vadd.f32 %v2647, %v2648
        %v2650 = vsel %vm1617, %v2604, 0.0
        %v2651 = vadd.f32 %v2649, %v2650
        %v2652 = vsel %vm1617, %v2605, 0.0
        %v2653 = vadd.f32 %v2651, %v2652
        %v2654 = vsel %vm1617, %v2606, 0.0
        %v2655 = vadd.f32 %v2653, %v2654
        %v2656 = vsel %vm1617, %v2607, 0.0
        %v2657 = vadd.f32 %v2655, %v2656
        %v2658 = vsel %vm1617, %v2608, 0.0
        %v2659 = vadd.f32 %v2657, %v2658
        %v2660 = vsel %vm1617, %v2609, 0.0
        %v2661 = vadd.f32 %v2659, %v2660
        %v2662 = vsel %vm1617, %v2610, 0.0
        %v2663 = vadd.f32 %v2661, %v2662
        %v2664 = vsel %vm1617, %v2611, 0.0
        %v2665 = vadd.f32 %v2663, %v2664
        %v2666 = vsel %vm1617, %v2612, 0.0
        %v2667 = vadd.f32 %v2665, %v2666
        %v2668 = vsel %vm1617, %v2613, 0.0
        %v2669 = vadd.f32 %v2667, %v2668
        %v2670 = vsel %vm1617, %v2614, 0.0
        %v2671 = vadd.f32 %v2669, %v2670
        %v2672 = vsel %vm1617, %v2615, 0.0
        %v2673 = vadd.f32 %v2671, %v2672
        %v2674 = vsel %vm1617, %v2616, 0.0
        %v2675 = vadd.f32 %v2673, %v2674
        %v2676 = vsel %vm1617, %v2617, 0.0
        %v2677 = vadd.f32 %v2675, %v2676
        %v2678 = vsel %vm1617, %v2618, 0.0
        %v2679 = vadd.f32 %v2677, %v2678
        %v2680 = vsel %vm1617, %v2619, 0.0
        %v2681 = vadd.f32 %v2679, %v2680
        %v2682 = vsel %vm1617, %v2620, 0.0
        %v2683 = vadd.f32 %v2681, %v2682
        %v2684 = vrot.slane %v2683, 4
        %v2685 = vadd.f32 %v2683, %v2684
        %v2686 = vrot.slane %v2685, 2
        %v2687 = vadd.f32 %v2685, %v2686
        %v2688 = vrot.slane %v2687, 1
        %v2689 = vadd.f32 %v2687, %v2688
        %v2690 = vld [vmem:[#allocation2] sm:$0x1]
        %2692 = vset.pattern.permute.xlu0 0
        %2693 = vperm.xlu0 %2692, %v2690
        %v2694 = vpop.permute.xlu0 %2693
        %v2696 = vperm.slane %v2694, 0
        %v2697 = vadd.f32 %v2689, %v2696
        %vm2698 = vcmp.gt.f32.partialorder %v2697, 0.0
        %v2699 = vmul.f32 %v2697, 0.1
        %v2700 = vsel %vm2698, %v2697, %v2699
        %vm2701 = vcmask 65536
        %2702 = vst.msk [vmem:[%s781] sm:$0x1] %vm2701, %v2700
        %p2703 = scmp.lt.s32.totalorder %s37, 1
        %s2704 = scalar_select %p2703, %s37, 1
        %s2705 = scalar_lea.vmem %s17, %s2704
        // Predicated region
        $region141: #{fwd.1} parent=87 // pred_check
          %p2706 = pneg %p422
        $region142: #{fwd.1} parent=87 // pred_check_branch
          %2708 = sbr.rel (%p2706) target = $region144
        $region143: #{fwd.1} parent=87 // pred_region
          _
        $region144: #{fwd.1} parent=87 // pred_fallthru
          _
      $region88: #{fwd.1} parent=5 // pred_fallthru
        _
      %p2709 = scmp.le.s32.totalorder 2, %s32
      // Predicated region
      $region145: #{fwd.1} parent=5 // pred_check
        %p2710 = pneg %p2709
      $region146: #{fwd.1} parent=5 // pred_check_branch
        %2712 = sbr.rel (%p2710) target = $region148
      $region147: #{fwd.1} parent=5 // pred_region
        %s2713 = ssub.s32 %s32, 2
        // Predicated region
        $region149: #{fwd.1} parent=147 // pred_check
          %p2714 = pneg %p428
        $region150: #{fwd.1} parent=147 // pred_check_branch
          %2716 = sbr.rel (%p2714) target = $region152
        $region151: #{fwd.1} parent=147 // pred_region
          %p2717 = scmp.lt.s32.totalorder %s38, 1
          %s2718 = scalar_select %p2717, %s38, 1
          %s2719 = scalar_lea.vmem %s17, %s2718
        $region152: #{fwd.1} parent=147 // pred_fallthru
          _
      $region148: #{fwd.1} parent=5 // pred_fallthru
        _
    $region6: #{fwd.1} parent=1 // loop_footer
      %s36 = sadd.s32 1, %s32
    $region7: #{fwd.1} parent=1 // loop_footer_branch
      %31 = sbr.rel target = $region3
    $region8: #{fwd.1} parent=1 // loop_exit
      _
    %2720 = vsyncpa [#allocation4], 1
    %s2721 = scalar_lea.sflag [#allocation4], 1
    %2722 = vsyncpa %s2721, 1
    %2723 = vsyncpa [#allocation6], 1
    %2724 = vsyncpa [#allocation9], 1
    %2725 = vsyncpa [#allocation12], 1
    %2726 = vsyncpa [#allocation15], 1
    %2727 = vsyncpa [#allocation18], 1
    %2728 = vsyncpa [#allocation21], 1

</llo_original>
